<compile_context>
chip_gen: v7x
topology: tpu7x:2x2x1
jax: 0.10.0
libtpu: 0.0.40
codegen_flags: <defaults>
</compile_context>

<pallas_src>
import math
import jax
import jax.numpy as jnp
from jax.experimental import pallas as pl
from jax.experimental.pallas import tpu as pltpu

# ---- model dims (small, consistent with the module) ----
B = 2            # batch
S = 8            # seq_len
D = 32           # d_model
H = 4            # num_heads
HD = D // H      # head_dim
DF = 4 * D       # MLP hidden (128)
BS = B * S       # flattened rows processed per invocation
EPS = 1e-5       # nn.LayerNorm default eps
NEG_BIG = -1e30  # additive mask value (finite, avoids -inf arithmetic)

# rows of the packed small-parameter slab (one param per row, lane-0 aligned)
R_LN1W, R_LN1B, R_LN2W, R_LN2B = 0, 1, 2, 3
R_BQ, R_BK, R_BV, R_BPROJ, R_BFC1, R_BFC2 = 4, 5, 6, 7, 8, 9
SLAB_ROWS = 16   # padded to a multiple of 8 sublanes


def _layernorm(x, w, b):
    mu = jnp.mean(x, axis=-1, keepdims=True)
    var = jnp.mean((x - mu) ** 2, axis=-1, keepdims=True)
    return (x - mu) * jax.lax.rsqrt(var + EPS) * w + b


def transformer_block_kernel(
    x_ref,        # (BS, D)        f32
    par_ref,      # (16, 128)      f32   packed LN params + biases (Q bias pre-scaled)
    mask_ref,     # (BS, BS)       f32   additive block-diagonal batch mask
    w_qkv_ref,    # (3, D, D)      bf16  [w_q (pre-scaled by 1/sqrt(HD)), w_k, w_v]
    w_ph_ref,     # (H, HD, D)     bf16  w_proj split by head rows
    w_fc1_ref,    # (D, 4D)        bf16
    w_fc2_ref,    # (4D, D)        bf16
    o_ref,        # (BS, D)        f32
):
    x = x_ref[...]                                                      # (BS, D) f32
    par = par_ref[...]                                                  # (16, 128) f32

    ln1_w, ln1_b = par[R_LN1W, :D], par[R_LN1B, :D]
    ln2_w, ln2_b = par[R_LN2W, :D], par[R_LN2B, :D]
    b_q, b_k, b_v = par[R_BQ, :D], par[R_BK, :D], par[R_BV, :D]
    b_proj, b_fc2 = par[R_BPROJ, :D], par[R_BFC2, :D]
    b_fc1 = par[R_BFC1, :DF]

    # ---- LN1 (f32) + Q/K/V projections (three lane-0-aligned bf16 dots, f32 acc) ----
    h = _layernorm(x, ln1_w, ln1_b).astype(jnp.bfloat16)                # (BS, D)
    q = (jnp.dot(h, w_qkv_ref[0], preferred_element_type=jnp.float32)
         + b_q).astype(jnp.bfloat16)                                    # scale folded in
    k = (jnp.dot(h, w_qkv_ref[1], preferred_element_type=jnp.float32)
         + b_k).astype(jnp.bfloat16)
    v = (jnp.dot(h, w_qkv_ref[2], preferred_element_type=jnp.float32)
         + b_v).astype(jnp.bfloat16)

    mask = mask_ref[...]                                                # (BS, BS) f32

    # Static (trace-time unrolled) loop over heads: plain 2-D MXU dots on static
    # lane sub-slices; head outputs are accumulated straight into the projection
    # accumulator (no concatenate, no separate attn @ w_proj dot).
    proj_acc = jnp.zeros((BS, D), jnp.float32)
    for hh in range(H):
        lo = hh * HD
        q_h, k_h, v_h = q[:, lo:lo + HD], k[:, lo:lo + HD], v[:, lo:lo + HD]
        s = jax.lax.dot_general(q_h, k_h, (((1,), (1,)), ((), ())),
                                preferred_element_type=jnp.float32)     # (BS, BS)
        s = s + mask                                                    # block-diag batches
        s = s - jnp.max(s, axis=-1, keepdims=True)
        p = jnp.exp(s)
        p = p * pl.reciprocal(jnp.sum(p, axis=-1, keepdims=True), approx=True)
        head_out = jnp.dot(p.astype(jnp.bfloat16), v_h,
                           preferred_element_type=jnp.float32)          # (BS, HD)
        proj_acc = proj_acc + jnp.dot(head_out.astype(jnp.bfloat16), w_ph_ref[hh],
                                      preferred_element_type=jnp.float32)

    x1 = x + proj_acc + b_proj                                          # residual 1

    # ---- LN2 (f32) + MLP (bf16 matmuls, tanh GELU on the EUP) ----
    h2 = _layernorm(x1, ln2_w, ln2_b).astype(jnp.bfloat16)
    m = jnp.dot(h2, w_fc1_ref[...], preferred_element_type=jnp.float32) + b_fc1
    m = jax.nn.gelu(m, approximate=True)   # tanh GELU (EUP); ~1e-3 delta vs erf parity
    m = jnp.dot(m.astype(jnp.bfloat16), w_fc2_ref[...],
                preferred_element_type=jnp.float32) + b_fc2

    # TODO(synk): at realistic sizes (D >= 128) emit a lane-dense (multiple-of-128)
    # output slab; at D=32 the masked store is negligible.
    o_ref[...] = x1 + m                                                 # residual 2


def transformer_block(x, kp):
    """x: (B, S, D) float32.  kp: kernel params from prep_kernel_params()."""
    args = (
        x.reshape(BS, D),
        kp["param_slab"],
        kp["mask"],
        kp["w_qkv"],
        kp["w_proj_heads"],
        kp["w_fc1"],
        kp["w_fc2"],
    )
    # Single invocation, no grid: at ~0.4 MFLOP this kernel is fixed-overhead bound,
    # so one step over the whole (B*S, D) slab beats any grid split (including a 2-TC
    # split on v7x).  All weights (~50 KiB) live as full resident VMEM blocks.
    out = pl.pallas_call(
        transformer_block_kernel,
        out_shape=jax.ShapeDtypeStruct((BS, D), jnp.float32),
        in_specs=[pl.BlockSpec(memory_space=pltpu.MemorySpace.VMEM) for _ in args],
        out_specs=pl.BlockSpec(memory_space=pltpu.MemorySpace.VMEM),
    )(*args)
    return out.reshape(B, S, D)


def init_params(key):
    ks = jax.random.split(key, 8)
    scale = 0.05
    return {
        # LayerNorm default init: weight=1, bias=0
        "ln1_w": jnp.ones((1, D), jnp.float32),
        "ln1_b": jnp.zeros((1, D), jnp.float32),
        "ln2_w": jnp.ones((1, D), jnp.float32),
        "ln2_b": jnp.zeros((1, D), jnp.float32),
        # Linear weights stored as (in, out) so x @ W + b == PyTorch x @ W.T + b
        "w_qkv": scale * jax.random.normal(ks[0], (D, 3 * D), jnp.float32),
        "b_qkv": scale * jax.random.normal(ks[1], (1, 3 * D), jnp.float32),
        "w_proj": scale * jax.random.normal(ks[2], (D, D), jnp.float32),
        "b_proj": scale * jax.random.normal(ks[3], (1, D), jnp.float32),
        "w_fc1": scale * jax.random.normal(ks[4], (D, 4 * D), jnp.float32),
        "b_fc1": scale * jax.random.normal(ks[5], (1, 4 * D), jnp.float32),
        "w_fc2": scale * jax.random.normal(ks[6], (4 * D, D), jnp.float32),
        "b_fc2": scale * jax.random.normal(ks[7], (1, D), jnp.float32),
    }


def prep_kernel_params(p):
    """One-time (outside the hot path) parameter transform for the kernel:
       * split QKV into three lane-0-aligned (D, D) weights, fold 1/sqrt(head_dim)
         into the Q weight and bias,
       * split w_proj by head rows into (H, HD, D) for per-head accumulation,
       * cast matmul weights to bf16 (biases / LN params stay f32),
       * pack all small f32 params into one (16, 128) slab (one row each),
       * precompute the additive block-diagonal batch mask."""
    inv = 1.0 / math.sqrt(HD)

    w_q = (p["w_qkv"][:, 0 * D:1 * D] * inv).astype(jnp.bfloat16)
    w_k = p["w_qkv"][:, 1 * D:2 * D].astype(jnp.bfloat16)
    w_v = p["w_qkv"][:, 2 * D:3 * D].astype(jnp.bfloat16)
    w_qkv = jnp.stack([w_q, w_k, w_v], axis=0)                    # (3, D, D) bf16

    w_proj_heads = p["w_proj"].reshape(H, HD, D).astype(jnp.bfloat16)  # (H, HD, D) bf16

    slab = jnp.zeros((SLAB_ROWS, 128), jnp.float32)
    rows = [
        (R_LN1W, p["ln1_w"][0]),
        (R_LN1B, p["ln1_b"][0]),
        (R_LN2W, p["ln2_w"][0]),
        (R_LN2B, p["ln2_b"][0]),
        (R_BQ, p["b_qkv"][0, 0 * D:1 * D] * inv),
        (R_BK, p["b_qkv"][0, 1 * D:2 * D]),
        (R_BV, p["b_qkv"][0, 2 * D:3 * D]),
        (R_BPROJ, p["b_proj"][0]),
        (R_BFC1, p["b_fc1"][0]),
        (R_BFC2, p["b_fc2"][0]),
    ]
    for r, vec in rows:
        slab = slab.at[r, :vec.shape[-1]].set(vec)

    # Additive block-diagonal batch mask: 0 where same batch, NEG_BIG otherwise.
    row_b = jnp.arange(BS)[:, None] // S
    col_b = jnp.arange(BS)[None, :] // S
    mask = jnp.where(row_b == col_b, 0.0, NEG_BIG).astype(jnp.float32)   # (BS, BS)

    return {
        "param_slab": slab,
        "mask": mask,
        "w_qkv": w_qkv,
        "w_proj_heads": w_proj_heads,
        "w_fc1": p["w_fc1"].astype(jnp.bfloat16),
        "w_fc2": p["w_fc2"].astype(jnp.bfloat16),
    }


def reference_forward(x, p):
    """Pure-JAX f32 reference mirroring the PyTorch module (mask=None)."""
    def ln(x, w, b):
        mu = x.mean(-1, keepdims=True)
        var = ((x - mu) ** 2).mean(-1, keepdims=True)
        return (x - mu) / jnp.sqrt(var + EPS) * w + b

    h = ln(x, p["ln1_w"][0], p["ln1_b"][0])
    qkv = h @ p["w_qkv"] + p["b_qkv"][0]
    qkv = qkv.reshape(B, S, 3, H, HD).transpose(2, 0, 3, 1, 4)
    q, k, v = qkv[0], qkv[1], qkv[2]                       # (B, H, S, HD)
    attn = (q @ jnp.swapaxes(k, -2, -1)) / math.sqrt(HD)   # (B, H, S, S)
    attn = jax.nn.softmax(attn, axis=-1)
    out = (attn @ v).transpose(0, 2, 1, 3).reshape(B, S, D)
    out = out @ p["w_proj"] + p["b_proj"][0]
    x1 = x + out
    h2 = ln(x1, p["ln2_w"][0], p["ln2_b"][0])
    m = h2 @ p["w_fc1"] + p["b_fc1"][0]
    m = jax.nn.gelu(m, approximate=False)                  # PyTorch nn.GELU() (erf)
    m = m @ p["w_fc2"] + p["b_fc2"][0]
    return x1 + m


if __name__ == "__main__":
    key = jax.random.PRNGKey(0)
    kx, kp_key = jax.random.split(key)
    x = jax.random.normal(kx, (B, S, D), jnp.float32)
    params = init_params(kp_key)
    kernel_params = prep_kernel_params(params)   # one-time: split/scale/pack weights

    y = transformer_block(x, kernel_params)
    y = jax.block_until_ready(y)

    y_ref = reference_forward(x, params)
    assert y.shape == (B, S, D)
    max_err = float(jnp.max(jnp.abs(y - y_ref)))
    # bf16 matmul operands + approx reciprocal + tanh GELU => looser tolerance than f32.
    assert jnp.allclose(y, y_ref, rtol=2e-2, atol=2e-2), \
        f"mismatch vs reference (max abs err {max_err})"

    print("KERNEL_OK")
</pallas_src>

<mosaic_0001>
module attributes {stable_mosaic.version = 11 : i64} {
  func.func @transformer_block_kernel(%arg0: memref<16x32xf32, #tpu.memory_space<vmem>>, %arg1: memref<16x128xf32, #tpu.memory_space<vmem>>, %arg2: memref<16x16xf32, #tpu.memory_space<vmem>>, %arg3: memref<3x32x32xbf16, #tpu.memory_space<vmem>>, %arg4: memref<4x8x32xbf16, #tpu.memory_space<vmem>>, %arg5: memref<32x128xbf16, #tpu.memory_space<vmem>>, %arg6: memref<128x32xbf16, #tpu.memory_space<vmem>>, %arg7: memref<16x32xf32, #tpu.memory_space<vmem>>) attributes {dimension_semantics = [], scalar_prefetch = 0 : i64, scratch_operands = 0 : i64, tpu.core_type = #tpu.core_type<tc>} {
    %c0 = arith.constant 0 : index
    %c0_0 = arith.constant 0 : index
    %0 = vector.load %arg0[%c0, %c0_0] : memref<16x32xf32, #tpu.memory_space<vmem>>, vector<16x32xf32>
    %c0_1 = arith.constant 0 : index
    %c0_2 = arith.constant 0 : index
    %1 = vector.load %arg1[%c0_1, %c0_2] : memref<16x128xf32, #tpu.memory_space<vmem>>, vector<16x128xf32>
    %2 = vector.extract_strided_slice %1 {offsets = [0, 0], sizes = [1, 32], strides = [1, 1]} : vector<16x128xf32> to vector<1x32xf32>
    %3 = vector.shape_cast %2 : vector<1x32xf32> to vector<32xf32>
    %4 = vector.extract_strided_slice %1 {offsets = [1, 0], sizes = [1, 32], strides = [1, 1]} : vector<16x128xf32> to vector<1x32xf32>
    %5 = vector.shape_cast %4 : vector<1x32xf32> to vector<32xf32>
    %6 = vector.extract_strided_slice %1 {offsets = [2, 0], sizes = [1, 32], strides = [1, 1]} : vector<16x128xf32> to vector<1x32xf32>
    %7 = vector.shape_cast %6 : vector<1x32xf32> to vector<32xf32>
    %8 = vector.extract_strided_slice %1 {offsets = [3, 0], sizes = [1, 32], strides = [1, 1]} : vector<16x128xf32> to vector<1x32xf32>
    %9 = vector.shape_cast %8 : vector<1x32xf32> to vector<32xf32>
    %10 = vector.extract_strided_slice %1 {offsets = [4, 0], sizes = [1, 32], strides = [1, 1]} : vector<16x128xf32> to vector<1x32xf32>
    %11 = vector.shape_cast %10 : vector<1x32xf32> to vector<32xf32>
    %12 = vector.extract_strided_slice %1 {offsets = [5, 0], sizes = [1, 32], strides = [1, 1]} : vector<16x128xf32> to vector<1x32xf32>
    %13 = vector.shape_cast %12 : vector<1x32xf32> to vector<32xf32>
    %14 = vector.extract_strided_slice %1 {offsets = [6, 0], sizes = [1, 32], strides = [1, 1]} : vector<16x128xf32> to vector<1x32xf32>
    %15 = vector.shape_cast %14 : vector<1x32xf32> to vector<32xf32>
    %16 = vector.extract_strided_slice %1 {offsets = [7, 0], sizes = [1, 32], strides = [1, 1]} : vector<16x128xf32> to vector<1x32xf32>
    %17 = vector.shape_cast %16 : vector<1x32xf32> to vector<32xf32>
    %18 = vector.extract_strided_slice %1 {offsets = [9, 0], sizes = [1, 32], strides = [1, 1]} : vector<16x128xf32> to vector<1x32xf32>
    %19 = vector.shape_cast %18 : vector<1x32xf32> to vector<32xf32>
    %20 = vector.extract_strided_slice %1 {offsets = [8, 0], sizes = [1, 128], strides = [1, 1]} : vector<16x128xf32> to vector<1x128xf32>
    %21 = vector.shape_cast %20 : vector<1x128xf32> to vector<128xf32>
    %cst = arith.constant dense<0.000000e+00> : vector<16xf32>
    %22 = vector.multi_reduction <add>, %0, %cst [1] : vector<16x32xf32> to vector<16xf32>
    %23 = vector.shape_cast %22 : vector<16xf32> to vector<16x1xf32>
    %cst_3 = arith.constant 3.200000e+01 : f32
    %24 = vector.broadcast %cst_3 : f32 to vector<16x1xf32>
    %25 = arith.divf %23, %24 : vector<16x1xf32>
    %26 = vector.broadcast %25 : vector<16x1xf32> to vector<16x32xf32>
    %27 = arith.subf %0, %26 : vector<16x32xf32>
    %28 = arith.mulf %27, %27 : vector<16x32xf32>
    %cst_4 = arith.constant dense<0.000000e+00> : vector<16xf32>
    %29 = vector.multi_reduction <add>, %28, %cst_4 [1] : vector<16x32xf32> to vector<16xf32>
    %30 = vector.shape_cast %29 : vector<16xf32> to vector<16x1xf32>
    %cst_5 = arith.constant 3.200000e+01 : f32
    %31 = vector.broadcast %cst_5 : f32 to vector<16x1xf32>
    %32 = arith.divf %30, %31 : vector<16x1xf32>
    %33 = vector.broadcast %25 : vector<16x1xf32> to vector<16x32xf32>
    %34 = arith.subf %0, %33 : vector<16x32xf32>
    %cst_6 = arith.constant 9.99999974E-6 : f32
    %35 = vector.broadcast %cst_6 : f32 to vector<16x1xf32>
    %36 = arith.addf %32, %35 : vector<16x1xf32>
    %37 = math.rsqrt %36 : vector<16x1xf32>
    %38 = vector.broadcast %37 : vector<16x1xf32> to vector<16x32xf32>
    %39 = arith.mulf %34, %38 : vector<16x32xf32>
    %40 = vector.shape_cast %3 : vector<32xf32> to vector<1x32xf32>
    %41 = vector.broadcast %40 : vector<1x32xf32> to vector<16x32xf32>
    %42 = arith.mulf %39, %41 : vector<16x32xf32>
    %43 = vector.shape_cast %5 : vector<32xf32> to vector<1x32xf32>
    %44 = vector.broadcast %43 : vector<1x32xf32> to vector<16x32xf32>
    %45 = arith.addf %42, %44 : vector<16x32xf32>
    %46 = arith.truncf %45 : vector<16x32xf32> to vector<16x32xbf16>
    %c0_7 = arith.constant 0 : index
    %c0_8 = arith.constant 0 : index
    %c0_9 = arith.constant 0 : index
    %47 = vector.load %arg3[%c0_7, %c0_8, %c0_9] : memref<3x32x32xbf16, #tpu.memory_space<vmem>>, vector<1x32x32xbf16>
    %48 = vector.shape_cast %47 : vector<1x32x32xbf16> to vector<32x32xbf16>
    %cst_10 = arith.constant dense<0.000000e+00> : vector<16x32xf32>
    %49 = tpu.matmul %46, %48, %cst_10 {dimension_numbers = #tpu.dot_dimension_numbers<[1], [0], [0], [1], [0, 0, 1, 1], [], []>} : vector<16x32xbf16>, vector<32x32xbf16>, vector<16x32xf32> -> vector<16x32xf32>
    %50 = vector.shape_cast %11 : vector<32xf32> to vector<1x32xf32>
    %51 = vector.broadcast %50 : vector<1x32xf32> to vector<16x32xf32>
    %52 = arith.addf %49, %51 : vector<16x32xf32>
    %53 = arith.truncf %52 : vector<16x32xf32> to vector<16x32xbf16>
    %c1 = arith.constant 1 : index
    %c0_11 = arith.constant 0 : index
    %c0_12 = arith.constant 0 : index
    %54 = vector.load %arg3[%c1, %c0_11, %c0_12] : memref<3x32x32xbf16, #tpu.memory_space<vmem>>, vector<1x32x32xbf16>
    %55 = vector.shape_cast %54 : vector<1x32x32xbf16> to vector<32x32xbf16>
    %cst_13 = arith.constant dense<0.000000e+00> : vector<16x32xf32>
    %56 = tpu.matmul %46, %55, %cst_13 {dimension_numbers = #tpu.dot_dimension_numbers<[1], [0], [0], [1], [0, 0, 1, 1], [], []>} : vector<16x32xbf16>, vector<32x32xbf16>, vector<16x32xf32> -> vector<16x32xf32>
    %57 = vector.shape_cast %13 : vector<32xf32> to vector<1x32xf32>
    %58 = vector.broadcast %57 : vector<1x32xf32> to vector<16x32xf32>
    %59 = arith.addf %56, %58 : vector<16x32xf32>
    %60 = arith.truncf %59 : vector<16x32xf32> to vector<16x32xbf16>
    %c2 = arith.constant 2 : index
    %c0_14 = arith.constant 0 : index
    %c0_15 = arith.constant 0 : index
    %61 = vector.load %arg3[%c2, %c0_14, %c0_15] : memref<3x32x32xbf16, #tpu.memory_space<vmem>>, vector<1x32x32xbf16>
    %62 = vector.shape_cast %61 : vector<1x32x32xbf16> to vector<32x32xbf16>
    %cst_16 = arith.constant dense<0.000000e+00> : vector<16x32xf32>
    %63 = tpu.matmul %46, %62, %cst_16 {dimension_numbers = #tpu.dot_dimension_numbers<[1], [0], [0], [1], [0, 0, 1, 1], [], []>} : vector<16x32xbf16>, vector<32x32xbf16>, vector<16x32xf32> -> vector<16x32xf32>
    %64 = vector.shape_cast %15 : vector<32xf32> to vector<1x32xf32>
    %65 = vector.broadcast %64 : vector<1x32xf32> to vector<16x32xf32>
    %66 = arith.addf %63, %65 : vector<16x32xf32>
    %67 = arith.truncf %66 : vector<16x32xf32> to vector<16x32xbf16>
    %c0_17 = arith.constant 0 : index
    %c0_18 = arith.constant 0 : index
    %68 = vector.load %arg2[%c0_17, %c0_18] : memref<16x16xf32, #tpu.memory_space<vmem>>, vector<16x16xf32>
    %cst_19 = arith.constant 0.000000e+00 : f32
    %69 = vector.broadcast %cst_19 : f32 to vector<16x32xf32>
    %70 = vector.extract_strided_slice %53 {offsets = [0, 0], sizes = [16, 8], strides = [1, 1]} : vector<16x32xbf16> to vector<16x8xbf16>
    %71 = vector.extract_strided_slice %60 {offsets = [0, 0], sizes = [16, 8], strides = [1, 1]} : vector<16x32xbf16> to vector<16x8xbf16>
    %72 = vector.extract_strided_slice %67 {offsets = [0, 0], sizes = [16, 8], strides = [1, 1]} : vector<16x32xbf16> to vector<16x8xbf16>
    %cst_20 = arith.constant dense<0.000000e+00> : vector<16x16xf32>
    %73 = tpu.matmul %70, %71, %cst_20 {dimension_numbers = #tpu.dot_dimension_numbers<[1], [1], [0], [0], [0, 0, 1, 0], [], []>} : vector<16x8xbf16>, vector<16x8xbf16>, vector<16x16xf32> -> vector<16x16xf32>
    %74 = arith.addf %73, %68 : vector<16x16xf32>
    %cst_21 = arith.constant dense<0xFF800000> : vector<16xf32>
    %75 = vector.multi_reduction <maximumf>, %74, %cst_21 [1] : vector<16x16xf32> to vector<16xf32>
    %76 = vector.shape_cast %75 : vector<16xf32> to vector<16x1xf32>
    %77 = vector.broadcast %76 : vector<16x1xf32> to vector<16x16xf32>
    %78 = arith.subf %74, %77 : vector<16x16xf32>
    %79 = math.exp %78 : vector<16x16xf32>
    %cst_22 = arith.constant dense<0.000000e+00> : vector<16xf32>
    %80 = vector.multi_reduction <add>, %79, %cst_22 [1] : vector<16x16xf32> to vector<16xf32>
    %81 = vector.shape_cast %80 : vector<16xf32> to vector<16x1xf32>
    %82 = tpu.reciprocal %81 {approx = true} : vector<16x1xf32> -> vector<16x1xf32>
    %83 = vector.broadcast %82 : vector<16x1xf32> to vector<16x16xf32>
    %84 = arith.mulf %79, %83 : vector<16x16xf32>
    %85 = arith.truncf %84 : vector<16x16xf32> to vector<16x16xbf16>
    %cst_23 = arith.constant dense<0.000000e+00> : vector<16x8xf32>
    %86 = tpu.matmul %85, %72, %cst_23 {dimension_numbers = #tpu.dot_dimension_numbers<[1], [0], [0], [1], [0, 0, 1, 1], [], []>} : vector<16x16xbf16>, vector<16x8xbf16>, vector<16x8xf32> -> vector<16x8xf32>
    %87 = arith.truncf %86 : vector<16x8xf32> to vector<16x8xbf16>
    %c0_24 = arith.constant 0 : index
    %c0_25 = arith.constant 0 : index
    %c0_26 = arith.constant 0 : index
    %88 = vector.load %arg4[%c0_24, %c0_25, %c0_26] : memref<4x8x32xbf16, #tpu.memory_space<vmem>>, vector<1x8x32xbf16>
    %89 = vector.shape_cast %88 : vector<1x8x32xbf16> to vector<8x32xbf16>
    %cst_27 = arith.constant dense<0.000000e+00> : vector<16x32xf32>
    %90 = tpu.matmul %87, %89, %cst_27 {dimension_numbers = #tpu.dot_dimension_numbers<[1], [0], [0], [1], [0, 0, 1, 1], [], []>} : vector<16x8xbf16>, vector<8x32xbf16>, vector<16x32xf32> -> vector<16x32xf32>
    %91 = arith.addf %69, %90 : vector<16x32xf32>
    %92 = vector.extract_strided_slice %53 {offsets = [0, 8], sizes = [16, 8], strides = [1, 1]} : vector<16x32xbf16> to vector<16x8xbf16>
    %93 = vector.extract_strided_slice %60 {offsets = [0, 8], sizes = [16, 8], strides = [1, 1]} : vector<16x32xbf16> to vector<16x8xbf16>
    %94 = vector.extract_strided_slice %67 {offsets = [0, 8], sizes = [16, 8], strides = [1, 1]} : vector<16x32xbf16> to vector<16x8xbf16>
    %cst_28 = arith.constant dense<0.000000e+00> : vector<16x16xf32>
    %95 = tpu.matmul %92, %93, %cst_28 {dimension_numbers = #tpu.dot_dimension_numbers<[1], [1], [0], [0], [0, 0, 1, 0], [], []>} : vector<16x8xbf16>, vector<16x8xbf16>, vector<16x16xf32> -> vector<16x16xf32>
    %96 = arith.addf %95, %68 : vector<16x16xf32>
    %cst_29 = arith.constant dense<0xFF800000> : vector<16xf32>
    %97 = vector.multi_reduction <maximumf>, %96, %cst_29 [1] : vector<16x16xf32> to vector<16xf32>
    %98 = vector.shape_cast %97 : vector<16xf32> to vector<16x1xf32>
    %99 = vector.broadcast %98 : vector<16x1xf32> to vector<16x16xf32>
    %100 = arith.subf %96, %99 : vector<16x16xf32>
    %101 = math.exp %100 : vector<16x16xf32>
    %cst_30 = arith.constant dense<0.000000e+00> : vector<16xf32>
    %102 = vector.multi_reduction <add>, %101, %cst_30 [1] : vector<16x16xf32> to vector<16xf32>
    %103 = vector.shape_cast %102 : vector<16xf32> to vector<16x1xf32>
    %104 = tpu.reciprocal %103 {approx = true} : vector<16x1xf32> -> vector<16x1xf32>
    %105 = vector.broadcast %104 : vector<16x1xf32> to vector<16x16xf32>
    %106 = arith.mulf %101, %105 : vector<16x16xf32>
    %107 = arith.truncf %106 : vector<16x16xf32> to vector<16x16xbf16>
    %cst_31 = arith.constant dense<0.000000e+00> : vector<16x8xf32>
    %108 = tpu.matmul %107, %94, %cst_31 {dimension_numbers = #tpu.dot_dimension_numbers<[1], [0], [0], [1], [0, 0, 1, 1], [], []>} : vector<16x16xbf16>, vector<16x8xbf16>, vector<16x8xf32> -> vector<16x8xf32>
    %109 = arith.truncf %108 : vector<16x8xf32> to vector<16x8xbf16>
    %c1_32 = arith.constant 1 : index
    %c0_33 = arith.constant 0 : index
    %c0_34 = arith.constant 0 : index
    %110 = vector.load %arg4[%c1_32, %c0_33, %c0_34] : memref<4x8x32xbf16, #tpu.memory_space<vmem>>, vector<1x8x32xbf16>
    %111 = vector.shape_cast %110 : vector<1x8x32xbf16> to vector<8x32xbf16>
    %cst_35 = arith.constant dense<0.000000e+00> : vector<16x32xf32>
    %112 = tpu.matmul %109, %111, %cst_35 {dimension_numbers = #tpu.dot_dimension_numbers<[1], [0], [0], [1], [0, 0, 1, 1], [], []>} : vector<16x8xbf16>, vector<8x32xbf16>, vector<16x32xf32> -> vector<16x32xf32>
    %113 = arith.addf %91, %112 : vector<16x32xf32>
    %114 = vector.extract_strided_slice %53 {offsets = [0, 16], sizes = [16, 8], strides = [1, 1]} : vector<16x32xbf16> to vector<16x8xbf16>
    %115 = vector.extract_strided_slice %60 {offsets = [0, 16], sizes = [16, 8], strides = [1, 1]} : vector<16x32xbf16> to vector<16x8xbf16>
    %116 = vector.extract_strided_slice %67 {offsets = [0, 16], sizes = [16, 8], strides = [1, 1]} : vector<16x32xbf16> to vector<16x8xbf16>
    %cst_36 = arith.constant dense<0.000000e+00> : vector<16x16xf32>
    %117 = tpu.matmul %114, %115, %cst_36 {dimension_numbers = #tpu.dot_dimension_numbers<[1], [1], [0], [0], [0, 0, 1, 0], [], []>} : vector<16x8xbf16>, vector<16x8xbf16>, vector<16x16xf32> -> vector<16x16xf32>
    %118 = arith.addf %117, %68 : vector<16x16xf32>
    %cst_37 = arith.constant dense<0xFF800000> : vector<16xf32>
    %119 = vector.multi_reduction <maximumf>, %118, %cst_37 [1] : vector<16x16xf32> to vector<16xf32>
    %120 = vector.shape_cast %119 : vector<16xf32> to vector<16x1xf32>
    %121 = vector.broadcast %120 : vector<16x1xf32> to vector<16x16xf32>
    %122 = arith.subf %118, %121 : vector<16x16xf32>
    %123 = math.exp %122 : vector<16x16xf32>
    %cst_38 = arith.constant dense<0.000000e+00> : vector<16xf32>
    %124 = vector.multi_reduction <add>, %123, %cst_38 [1] : vector<16x16xf32> to vector<16xf32>
    %125 = vector.shape_cast %124 : vector<16xf32> to vector<16x1xf32>
    %126 = tpu.reciprocal %125 {approx = true} : vector<16x1xf32> -> vector<16x1xf32>
    %127 = vector.broadcast %126 : vector<16x1xf32> to vector<16x16xf32>
    %128 = arith.mulf %123, %127 : vector<16x16xf32>
    %129 = arith.truncf %128 : vector<16x16xf32> to vector<16x16xbf16>
    %cst_39 = arith.constant dense<0.000000e+00> : vector<16x8xf32>
    %130 = tpu.matmul %129, %116, %cst_39 {dimension_numbers = #tpu.dot_dimension_numbers<[1], [0], [0], [1], [0, 0, 1, 1], [], []>} : vector<16x16xbf16>, vector<16x8xbf16>, vector<16x8xf32> -> vector<16x8xf32>
    %131 = arith.truncf %130 : vector<16x8xf32> to vector<16x8xbf16>
    %c2_40 = arith.constant 2 : index
    %c0_41 = arith.constant 0 : index
    %c0_42 = arith.constant 0 : index
    %132 = vector.load %arg4[%c2_40, %c0_41, %c0_42] : memref<4x8x32xbf16, #tpu.memory_space<vmem>>, vector<1x8x32xbf16>
    %133 = vector.shape_cast %132 : vector<1x8x32xbf16> to vector<8x32xbf16>
    %cst_43 = arith.constant dense<0.000000e+00> : vector<16x32xf32>
    %134 = tpu.matmul %131, %133, %cst_43 {dimension_numbers = #tpu.dot_dimension_numbers<[1], [0], [0], [1], [0, 0, 1, 1], [], []>} : vector<16x8xbf16>, vector<8x32xbf16>, vector<16x32xf32> -> vector<16x32xf32>
    %135 = arith.addf %113, %134 : vector<16x32xf32>
    %136 = vector.extract_strided_slice %53 {offsets = [0, 24], sizes = [16, 8], strides = [1, 1]} : vector<16x32xbf16> to vector<16x8xbf16>
    %137 = vector.extract_strided_slice %60 {offsets = [0, 24], sizes = [16, 8], strides = [1, 1]} : vector<16x32xbf16> to vector<16x8xbf16>
    %138 = vector.extract_strided_slice %67 {offsets = [0, 24], sizes = [16, 8], strides = [1, 1]} : vector<16x32xbf16> to vector<16x8xbf16>
    %cst_44 = arith.constant dense<0.000000e+00> : vector<16x16xf32>
    %139 = tpu.matmul %136, %137, %cst_44 {dimension_numbers = #tpu.dot_dimension_numbers<[1], [1], [0], [0], [0, 0, 1, 0], [], []>} : vector<16x8xbf16>, vector<16x8xbf16>, vector<16x16xf32> -> vector<16x16xf32>
    %140 = arith.addf %139, %68 : vector<16x16xf32>
    %cst_45 = arith.constant dense<0xFF800000> : vector<16xf32>
    %141 = vector.multi_reduction <maximumf>, %140, %cst_45 [1] : vector<16x16xf32> to vector<16xf32>
    %142 = vector.shape_cast %141 : vector<16xf32> to vector<16x1xf32>
    %143 = vector.broadcast %142 : vector<16x1xf32> to vector<16x16xf32>
    %144 = arith.subf %140, %143 : vector<16x16xf32>
    %145 = math.exp %144 : vector<16x16xf32>
    %cst_46 = arith.constant dense<0.000000e+00> : vector<16xf32>
    %146 = vector.multi_reduction <add>, %145, %cst_46 [1] : vector<16x16xf32> to vector<16xf32>
    %147 = vector.shape_cast %146 : vector<16xf32> to vector<16x1xf32>
    %148 = tpu.reciprocal %147 {approx = true} : vector<16x1xf32> -> vector<16x1xf32>
    %149 = vector.broadcast %148 : vector<16x1xf32> to vector<16x16xf32>
    %150 = arith.mulf %145, %149 : vector<16x16xf32>
    %151 = arith.truncf %150 : vector<16x16xf32> to vector<16x16xbf16>
    %cst_47 = arith.constant dense<0.000000e+00> : vector<16x8xf32>
    %152 = tpu.matmul %151, %138, %cst_47 {dimension_numbers = #tpu.dot_dimension_numbers<[1], [0], [0], [1], [0, 0, 1, 1], [], []>} : vector<16x16xbf16>, vector<16x8xbf16>, vector<16x8xf32> -> vector<16x8xf32>
    %153 = arith.truncf %152 : vector<16x8xf32> to vector<16x8xbf16>
    %c3 = arith.constant 3 : index
    %c0_48 = arith.constant 0 : index
    %c0_49 = arith.constant 0 : index
    %154 = vector.load %arg4[%c3, %c0_48, %c0_49] : memref<4x8x32xbf16, #tpu.memory_space<vmem>>, vector<1x8x32xbf16>
    %155 = vector.shape_cast %154 : vector<1x8x32xbf16> to vector<8x32xbf16>
    %cst_50 = arith.constant dense<0.000000e+00> : vector<16x32xf32>
    %156 = tpu.matmul %153, %155, %cst_50 {dimension_numbers = #tpu.dot_dimension_numbers<[1], [0], [0], [1], [0, 0, 1, 1], [], []>} : vector<16x8xbf16>, vector<8x32xbf16>, vector<16x32xf32> -> vector<16x32xf32>
    %157 = arith.addf %135, %156 : vector<16x32xf32>
    %158 = arith.addf %0, %157 : vector<16x32xf32>
    %159 = vector.shape_cast %17 : vector<32xf32> to vector<1x32xf32>
    %160 = vector.broadcast %159 : vector<1x32xf32> to vector<16x32xf32>
    %161 = arith.addf %158, %160 : vector<16x32xf32>
    %cst_51 = arith.constant dense<0.000000e+00> : vector<16xf32>
    %162 = vector.multi_reduction <add>, %161, %cst_51 [1] : vector<16x32xf32> to vector<16xf32>
    %163 = vector.shape_cast %162 : vector<16xf32> to vector<16x1xf32>
    %cst_52 = arith.constant 3.200000e+01 : f32
    %164 = vector.broadcast %cst_52 : f32 to vector<16x1xf32>
    %165 = arith.divf %163, %164 : vector<16x1xf32>
    %166 = vector.broadcast %165 : vector<16x1xf32> to vector<16x32xf32>
    %167 = arith.subf %161, %166 : vector<16x32xf32>
    %168 = arith.mulf %167, %167 : vector<16x32xf32>
    %cst_53 = arith.constant dense<0.000000e+00> : vector<16xf32>
    %169 = vector.multi_reduction <add>, %168, %cst_53 [1] : vector<16x32xf32> to vector<16xf32>
    %170 = vector.shape_cast %169 : vector<16xf32> to vector<16x1xf32>
    %cst_54 = arith.constant 3.200000e+01 : f32
    %171 = vector.broadcast %cst_54 : f32 to vector<16x1xf32>
    %172 = arith.divf %170, %171 : vector<16x1xf32>
    %173 = vector.broadcast %165 : vector<16x1xf32> to vector<16x32xf32>
    %174 = arith.subf %161, %173 : vector<16x32xf32>
    %cst_55 = arith.constant 9.99999974E-6 : f32
    %175 = vector.broadcast %cst_55 : f32 to vector<16x1xf32>
    %176 = arith.addf %172, %175 : vector<16x1xf32>
    %177 = math.rsqrt %176 : vector<16x1xf32>
    %178 = vector.broadcast %177 : vector<16x1xf32> to vector<16x32xf32>
    %179 = arith.mulf %174, %178 : vector<16x32xf32>
    %180 = vector.shape_cast %7 : vector<32xf32> to vector<1x32xf32>
    %181 = vector.broadcast %180 : vector<1x32xf32> to vector<16x32xf32>
    %182 = arith.mulf %179, %181 : vector<16x32xf32>
    %183 = vector.shape_cast %9 : vector<32xf32> to vector<1x32xf32>
    %184 = vector.broadcast %183 : vector<1x32xf32> to vector<16x32xf32>
    %185 = arith.addf %182, %184 : vector<16x32xf32>
    %186 = arith.truncf %185 : vector<16x32xf32> to vector<16x32xbf16>
    %c0_56 = arith.constant 0 : index
    %c0_57 = arith.constant 0 : index
    %187 = vector.load %arg5[%c0_56, %c0_57] : memref<32x128xbf16, #tpu.memory_space<vmem>>, vector<32x128xbf16>
    %cst_58 = arith.constant dense<0.000000e+00> : vector<16x128xf32>
    %188 = tpu.matmul %186, %187, %cst_58 {dimension_numbers = #tpu.dot_dimension_numbers<[1], [0], [0], [1], [0, 0, 1, 1], [], []>} : vector<16x32xbf16>, vector<32x128xbf16>, vector<16x128xf32> -> vector<16x128xf32>
    %189 = vector.shape_cast %21 : vector<128xf32> to vector<1x128xf32>
    %190 = vector.broadcast %189 : vector<1x128xf32> to vector<16x128xf32>
    %191 = arith.addf %188, %190 : vector<16x128xf32>
    %192 = arith.mulf %191, %191 : vector<16x128xf32>
    %193 = arith.mulf %191, %192 : vector<16x128xf32>
    %cst_59 = arith.constant 4.471500e-02 : f32
    %194 = vector.broadcast %cst_59 : f32 to vector<16x128xf32>
    %195 = arith.mulf %194, %193 : vector<16x128xf32>
    %196 = arith.addf %191, %195 : vector<16x128xf32>
    %cst_60 = arith.constant 0.797884583 : f32
    %197 = vector.broadcast %cst_60 : f32 to vector<16x128xf32>
    %198 = arith.mulf %197, %196 : vector<16x128xf32>
    %199 = math.tanh %198 : vector<16x128xf32>
    %cst_61 = arith.constant 1.000000e+00 : f32
    %200 = vector.broadcast %cst_61 : f32 to vector<16x128xf32>
    %201 = arith.addf %200, %199 : vector<16x128xf32>
    %cst_62 = arith.constant 5.000000e-01 : f32
    %202 = vector.broadcast %cst_62 : f32 to vector<16x128xf32>
    %203 = arith.mulf %202, %201 : vector<16x128xf32>
    %204 = arith.mulf %191, %203 : vector<16x128xf32>
    %205 = arith.truncf %204 : vector<16x128xf32> to vector<16x128xbf16>
    %c0_63 = arith.constant 0 : index
    %c0_64 = arith.constant 0 : index
    %206 = vector.load %arg6[%c0_63, %c0_64] : memref<128x32xbf16, #tpu.memory_space<vmem>>, vector<128x32xbf16>
    %cst_65 = arith.constant dense<0.000000e+00> : vector<16x32xf32>
    %207 = tpu.matmul %205, %206, %cst_65 {dimension_numbers = #tpu.dot_dimension_numbers<[1], [0], [0], [1], [0, 0, 1, 1], [], []>} : vector<16x128xbf16>, vector<128x32xbf16>, vector<16x32xf32> -> vector<16x32xf32>
    %208 = vector.shape_cast %19 : vector<32xf32> to vector<1x32xf32>
    %209 = vector.broadcast %208 : vector<1x32xf32> to vector<16x32xf32>
    %210 = arith.addf %207, %209 : vector<16x32xf32>
    %211 = arith.addf %161, %210 : vector<16x32xf32>
    %c0_66 = arith.constant 0 : index
    %c0_67 = arith.constant 0 : index
    %212 = vector.load %arg7[%c0_66, %c0_67] : memref<16x32xf32, #tpu.memory_space<vmem>>, vector<16x32xf32>
    tpu.vector_store %arg7[%c0_66, %c0_67], %211 {strides = array<i32>} : memref<16x32xf32, #tpu.memory_space<vmem>>, vector<16x32xf32>,
    return
  }
}

</mosaic_0001>

<llo_original>
// kernel: tpu_custom_call.1
$region0: #{tpu_custom_call.1}
  #allocation0 [shape = 'u32[]', space=smem, size = 0x4, offset = 0x4, fixed_abs, tag = 'smem constant byte address 0x4 - core index']
  #allocation1 [shape = 'u32[144,128]{1,0:T(1,128)}', space=vmem, size = 0x12000, scoped, tag = 'internal scratch']
  %s0 = inlined_call_operand.vmem [shape: f32[16,32], index: 0, kind: input, shape index: {}]
  %s1 = inlined_call_operand.vmem [shape: f32[16,128], index: 1, kind: input, shape index: {}]
  %s2 = inlined_call_operand.hbm [shape: f32[16,16], index: 2, kind: input, shape index: {}]
  %s3 = inlined_call_operand.vmem [shape: bf16[3,32,32], index: 3, kind: input, shape index: {}]
  %s4 = inlined_call_operand.hbm [shape: bf16[4,8,32], index: 4, kind: input, shape index: {}]
  %s5 = inlined_call_operand.hbm [shape: bf16[32,128], index: 5, kind: input, shape index: {}]
  %s6 = inlined_call_operand.vmem [shape: bf16[128,32], index: 6, kind: input, shape index: {}]
  %s7 = inlined_call_operand.hbm [shape: f32[16,32], index: 7, kind: output, shape index: {}]
  %s8 = sld [smem:[#allocation0]]
  $region50: #{tpu_custom_call.1} parent=0
    _
  %s10 = ssub.s32 1, %s8
  %s11 = scalar_select 0, %s10, %s8
  $region1: #{tpu_custom_call.1} parent=0
    #allocation2 [shape = 'u8[8192]{0}', space=vmem, size = 0x2000, scoped, tag = 'input window, operand 2, single buffered']
    #allocation3 [shape = 's32[1]{0}', space=sflag, size = 0x4, scoped, tag = 'scoped memory for tpu_custom_call.1']
    #allocation4 [shape = 's32[1]{0}', space=sflag, size = 0x4, scoped, tag = 'scoped memory for tpu_custom_call.1']
    #allocation5 [shape = 'u8[8192]{0}', space=vmem, size = 0x2000, scoped, tag = 'input window, operand 4, single buffered']
    #allocation6 [shape = 's32[1]{0}', space=sflag, size = 0x4, scoped, tag = 'scoped memory for tpu_custom_call.1']
    #allocation7 [shape = 'u8[8192]{0}', space=vmem, size = 0x2000, scoped, tag = 'input window, operand 5, single buffered']
    #allocation8 [shape = 'u8[8192]{0}', space=vmem, size = 0x2000, scoped, tag = 'output window, operand 0, single buffered']
    %12 = vsyncpa [#allocation3], 0
    %13 = vsyncpa [#allocation6], 0
    %14 = vsyncpa [#allocation4], 0
    // Predicated region
    $region2: #{tpu_custom_call.1} parent=1 // pred_check
      _
    $region3: #{tpu_custom_call.1} parent=1 // pred_check_branch
      %16 = sbr.rel (0) target = $region5
    $region4: #{tpu_custom_call.1} parent=1 // pred_region
      _
    $region5: #{tpu_custom_call.1} parent=1 // pred_fallthru
      _
    // Predicated region
    $region6: #{tpu_custom_call.1} parent=1 // pred_check
      _
    $region7: #{tpu_custom_call.1} parent=1 // pred_check_branch
      %18 = sbr.rel (0) target = $region9
    $region8: #{tpu_custom_call.1} parent=1 // pred_region
      _
    $region9: #{tpu_custom_call.1} parent=1 // pred_fallthru
      _
    // Predicated region
    $region10: #{tpu_custom_call.1} parent=1 // pred_check
      _
    $region11: #{tpu_custom_call.1} parent=1 // pred_check_branch
      %20 = sbr.rel (0) target = $region13
    $region12: #{tpu_custom_call.1} parent=1 // pred_region
      %s22 = ssub.s32 256, 256
      %23 = vsyncadd [#allocation3], %s22
      %s24 = sshll.u32 [#allocation2], 4
      %s25 = int_to_ptr.vmem [resolvable:$true] %s24
      %30 = dma.hbm_to_vmem [thread:$0]  %s2, 256, %s25, [#allocation3], 128, 128, 8
    $region13: #{tpu_custom_call.1} parent=1 // pred_fallthru
      _
    // Predicated region
    $region14: #{tpu_custom_call.1} parent=1 // pred_check
      _
    $region15: #{tpu_custom_call.1} parent=1 // pred_check_branch
      %32 = sbr.rel (0) target = $region17
    $region16: #{tpu_custom_call.1} parent=1 // pred_region
      _
    $region17: #{tpu_custom_call.1} parent=1 // pred_fallthru
      _
    // Predicated region
    $region18: #{tpu_custom_call.1} parent=1 // pred_check
      _
    $region19: #{tpu_custom_call.1} parent=1 // pred_check_branch
      %34 = sbr.rel (0) target = $region21
    $region20: #{tpu_custom_call.1} parent=1 // pred_region
      %s36 = ssub.s32 256, 256
      %37 = vsyncadd [#allocation6], %s36
      %s38 = sshll.u32 [#allocation5], 4
      %s39 = int_to_ptr.vmem [resolvable:$true] %s38
      %44 = dma.hbm_to_vmem [thread:$0]  %s4, 256, %s39, [#allocation6], 64, 64, 4
    $region21: #{tpu_custom_call.1} parent=1 // pred_fallthru
      _
    // Predicated region
    $region22: #{tpu_custom_call.1} parent=1 // pred_check
      _
    $region23: #{tpu_custom_call.1} parent=1 // pred_check_branch
      %46 = sbr.rel (0) target = $region25
    $region24: #{tpu_custom_call.1} parent=1 // pred_region
      %s48 = ssub.s32 256, 256
      %49 = vsyncadd [#allocation6], %s48
      %s50 = sshll.u32 [#allocation7], 4
      %s51 = int_to_ptr.vmem [resolvable:$true] %s50
      %56 = dma.hbm_to_vmem [thread:$0]  %s5, 256, %s51, [#allocation6], 64, 64, 4
    $region25: #{tpu_custom_call.1} parent=1 // pred_fallthru
      _
    // Predicated region
    $region26: #{tpu_custom_call.1} parent=1 // pred_check
      _
    $region27: #{tpu_custom_call.1} parent=1 // pred_check_branch
      %58 = sbr.rel (0) target = $region29
    $region28: #{tpu_custom_call.1} parent=1 // pred_region
      _
    $region29: #{tpu_custom_call.1} parent=1 // pred_fallthru
      _
    // Predicated region
    $region30: #{tpu_custom_call.1} parent=1 // pred_check
      _
    $region31: #{tpu_custom_call.1} parent=1 // pred_check_branch
      %60 = sbr.rel (0) target = $region33
    $region32: #{tpu_custom_call.1} parent=1 // pred_region
      %61 = dma.done [#allocation3], 256
    $region33: #{tpu_custom_call.1} parent=1 // pred_fallthru
      _
    // Predicated region
    $region34: #{tpu_custom_call.1} parent=1 // pred_check
      _
    $region35: #{tpu_custom_call.1} parent=1 // pred_check_branch
      %63 = sbr.rel (0) target = $region37
    $region36: #{tpu_custom_call.1} parent=1 // pred_region
      %64 = dma.done [#allocation6], 256
    $region37: #{tpu_custom_call.1} parent=1 // pred_fallthru
      _
    // Predicated region
    $region38: #{tpu_custom_call.1} parent=1 // pred_check
      _
    $region39: #{tpu_custom_call.1} parent=1 // pred_check_branch
      %66 = sbr.rel (0) target = $region41
    $region40: #{tpu_custom_call.1} parent=1 // pred_region
      %67 = dma.done [#allocation6], 256
    $region41: #{tpu_custom_call.1} parent=1 // pred_fallthru
      _
    %v69 = vld [vmem:[%s0] sm:$0xff]
    %v70 = vld [vmem:[%s0 + $0x8] sm:$0xff]
    %v71 = vld [vmem:[%s1] sm:$0xff]
    %v72 = vld [vmem:[%s1 + $0x8] sm:$0xff]
    %vm73 = vcmask 261120
    %v74 = vsel %vm73, %v69, 0.0
    %75 = vadd.xlane.f32.xlu0 %v74
    %v76 = vpop.xlane.xlu0 %75
    %v77 = vsel %vm73, %v70, 0.0
    %78 = vadd.xlane.f32.xlu0 %v77
    %v79 = vpop.xlane.xlu0 %78
    %v80 = vrcp.pop 32.0
    %v81 = vmul.f32 %v76, %v80
    %v82 = vmul.f32 %v79, %v80
    %v83 = vsub.f32 %v69, %v81
    %v84 = vsub.f32 %v70, %v82
    %v85 = vmul.f32 %v83, %v83
    %v86 = vmul.f32 %v84, %v84
    %v87 = vsel %vm73, %v85, 0.0
    %88 = vadd.xlane.f32.xlu0 %v87
    %v89 = vpop.xlane.xlu0 %88
    %v90 = vsel %vm73, %v86, 0.0
    %91 = vadd.xlane.f32.xlu0 %v90
    %v92 = vpop.xlane.xlu0 %91
    %v93 = vmul.f32 %v89, %v80
    %v94 = vmul.f32 %v92, %v80
    %v95 = vadd.f32 %v93, 1e-05
    %v96 = vadd.f32 %v94, 1e-05
    %v97 = vrsqrt.pop %v95
    %v98 = vrsqrt.pop %v96
    %v99 = vmul.f32 %v83, %v97
    %v100 = vmul.f32 %v84, %v98
    %v101 = vlaneseq
    %v102 = vshrl.u32 %v101, 7
    %v103 = vsub.s32 0, %v102
    %v104 = vrot.slane %v71, %v103
    %v105 = vmul.f32 %v99, %v104
    %v106 = vmul.f32 %v100, %v104
    %v107 = vlaneseq
    %v108 = vshrl.u32 %v107, 7
    %v109 = vsub.s32 1, %v108
    %v110 = vrot.slane %v71, %v109
    %v111 = vadd.f32 %v105, %v110
    %v112 = vadd.f32 %v106, %v110
    %v113 = vpack.c.bf16 %v112, %v111
    %v114 = vld [vmem:[%s3] sm:$0xf]
    %v115 = vld [vmem:[%s3 + $0x4] sm:$0xf]
    %v116 = vld [vmem:[%s3 + $0x8] sm:$0xf]
    %v117 = vld [vmem:[%s3 + $0xc] sm:$0xf]
    %v118 = vlaneseq
    %v119 = vshrl.u32 %v118, 7
    %v120 = vsub.s32 4, %v119
    %v121 = vrot.slane %v71, %v120
    %v126 = vunpack.c.l.b16 %v114
    %v127 = vunpack.c.l.b16 %v115
    %v128 = vunpack.c.l.b16 %v116
    %v129 = vunpack.c.l.b16 %v117
    %v130 = vpack.c.b16 %v127, %v126
    %v131 = vpack.c.b16 %v129, %v128
    %v135 = vsel %vm73, %v113, 0
    %137 = vmatprep.subr.bf16.mxu0 0
    %138 = vmatpush1.bf16.msra.mxu0 %v130
    %139 = vmatprep.subr.bf16.mxu0 0
    %140 = vmatpush1.bf16.msra.mxu0 %v131
    %141 = vmatprep.subr.bf16.mxu0 0
    %142 = vmatpush1.bf16.msra.mxu0 0
    %143 = vmatprep.subr.bf16.mxu0 0
    %144 = vmatpush1.bf16.msra.mxu0 0
    %145 = vmatprep.subr.bf16.mxu0 0
    %146 = vmatpush1.bf16.msra.mxu0 0
    %147 = vmatprep.subr.bf16.mxu0 0
    %148 = vmatpush1.bf16.msra.mxu0 0
    %149 = vmatprep.subr.bf16.mxu0 0
    %150 = vmatpush1.bf16.msra.mxu0 0
    %151 = vmatprep.subr.bf16.mxu0 0
    %152 = vmatpush1.bf16.msra.mxu0 0
    %153 = vmatprep.subr.bf16.mxu0 0
    %154 = vmatpush1.bf16.msra.mxu0 0
    %155 = vmatprep.subr.bf16.mxu0 0
    %156 = vmatpush1.bf16.msra.mxu0 0
    %157 = vmatprep.subr.bf16.mxu0 0
    %158 = vmatpush1.bf16.msra.mxu0 0
    %159 = vmatprep.subr.bf16.mxu0 0
    %160 = vmatpush1.bf16.msra.mxu0 0
    %161 = vmatprep.subr.bf16.mxu0 0
    %162 = vmatpush1.bf16.msra.mxu0 0
    %163 = vmatprep.subr.bf16.mxu0 0
    %164 = vmatpush1.bf16.msra.mxu0 0
    %165 = vmatprep.subr.bf16.mxu0 0
    %166 = vmatpush1.bf16.msra.mxu0 0
    %167 = vmatprep.subr.bf16.mxu0 0
    %168 = vmatpush1.bf16.msra.mxu0 0
    %169 = vmatprep.mubr.bf16.mxu0 0
    %170 = vmatmul.mubr.bf16.gmra.mrb[0].mxu0 %v135
    %v171 = vpop.f32.mrb[0].mxu0
    %v172 = vadd.f32 %v121, %v171
    %v173 = vpop.f32.mrb[0].mxu0
    %v174 = vpop.f32.mrb[0].mxu0
    %v175 = vadd.f32 %v121, %v174
    %v176 = vpop.f32.mrb[0].mxu0
    %177 = vdwg.mxu0
    %v178 = vpack.c.bf16 %v175, %v172
    %s179 = scalar_lea.vmem %s3, 16
    %v180 = vld [vmem:[%s179] sm:$0xf]
    %v181 = vld [vmem:[%s179 + $0x4] sm:$0xf]
    %v182 = vld [vmem:[%s179 + $0x8] sm:$0xf]
    %v183 = vld [vmem:[%s179 + $0xc] sm:$0xf]
    %v184 = vlaneseq
    %v185 = vshrl.u32 %v184, 7
    %v186 = vsub.s32 5, %v185
    %v187 = vrot.slane %v71, %v186
    %v192 = vunpack.c.l.b16 %v180
    %v193 = vunpack.c.l.b16 %v181
    %v194 = vunpack.c.l.b16 %v182
    %v195 = vunpack.c.l.b16 %v183
    %v196 = vpack.c.b16 %v193, %v192
    %v197 = vpack.c.b16 %v195, %v194
    %200 = vmatprep.subr.bf16.mxu0 0
    %201 = vmatpush1.bf16.msra.mxu0 %v196
    %202 = vmatprep.subr.bf16.mxu0 0
    %203 = vmatpush1.bf16.msra.mxu0 %v197
    %204 = vmatprep.subr.bf16.mxu0 0
    %205 = vmatpush1.bf16.msra.mxu0 0
    %206 = vmatprep.subr.bf16.mxu0 0
    %207 = vmatpush1.bf16.msra.mxu0 0
    %208 = vmatprep.subr.bf16.mxu0 0
    %209 = vmatpush1.bf16.msra.mxu0 0
    %210 = vmatprep.subr.bf16.mxu0 0
    %211 = vmatpush1.bf16.msra.mxu0 0
    %212 = vmatprep.subr.bf16.mxu0 0
    %213 = vmatpush1.bf16.msra.mxu0 0
    %214 = vmatprep.subr.bf16.mxu0 0
    %215 = vmatpush1.bf16.msra.mxu0 0
    %216 = vmatprep.subr.bf16.mxu0 0
    %217 = vmatpush1.bf16.msra.mxu0 0
    %218 = vmatprep.subr.bf16.mxu0 0
    %219 = vmatpush1.bf16.msra.mxu0 0
    %220 = vmatprep.subr.bf16.mxu0 0
    %221 = vmatpush1.bf16.msra.mxu0 0
    %222 = vmatprep.subr.bf16.mxu0 0
    %223 = vmatpush1.bf16.msra.mxu0 0
    %224 = vmatprep.subr.bf16.mxu0 0
    %225 = vmatpush1.bf16.msra.mxu0 0
    %226 = vmatprep.subr.bf16.mxu0 0
    %227 = vmatpush1.bf16.msra.mxu0 0
    %228 = vmatprep.subr.bf16.mxu0 0
    %229 = vmatpush1.bf16.msra.mxu0 0
    %230 = vmatprep.subr.bf16.mxu0 0
    %231 = vmatpush1.bf16.msra.mxu0 0
    %232 = vmatprep.mubr.bf16.mxu0 0
    %233 = vmatmul.mubr.bf16.gmra.mrb[0].mxu0 %v135
    %v234 = vpop.f32.mrb[0].mxu0
    %v235 = vadd.f32 %v187, %v234
    %v236 = vpop.f32.mrb[0].mxu0
    %v237 = vpop.f32.mrb[0].mxu0
    %v238 = vadd.f32 %v187, %v237
    %v239 = vpop.f32.mrb[0].mxu0
    %240 = vdwg.mxu0
    %v241 = vpack.c.bf16 %v238, %v235
    %s242 = scalar_lea.vmem %s3, 32
    %v243 = vld [vmem:[%s242] sm:$0xf]
    %v244 = vld [vmem:[%s242 + $0x4] sm:$0xf]
    %v245 = vld [vmem:[%s242 + $0x8] sm:$0xf]
    %v246 = vld [vmem:[%s242 + $0xc] sm:$0xf]
    %v247 = vlaneseq
    %v248 = vshrl.u32 %v247, 7
    %v249 = vsub.s32 6, %v248
    %v250 = vrot.slane %v71, %v249
    %v255 = vunpack.c.l.b16 %v243
    %v256 = vunpack.c.l.b16 %v244
    %v257 = vunpack.c.l.b16 %v245
    %v258 = vunpack.c.l.b16 %v246
    %v259 = vpack.c.b16 %v256, %v255
    %v260 = vpack.c.b16 %v258, %v257
    %263 = vmatprep.subr.bf16.mxu0 0
    %264 = vmatpush1.bf16.msra.mxu0 %v259
    %265 = vmatprep.subr.bf16.mxu0 0
    %266 = vmatpush1.bf16.msra.mxu0 %v260
    %267 = vmatprep.subr.bf16.mxu0 0
    %268 = vmatpush1.bf16.msra.mxu0 0
    %269 = vmatprep.subr.bf16.mxu0 0
    %270 = vmatpush1.bf16.msra.mxu0 0
    %271 = vmatprep.subr.bf16.mxu0 0
    %272 = vmatpush1.bf16.msra.mxu0 0
    %273 = vmatprep.subr.bf16.mxu0 0
    %274 = vmatpush1.bf16.msra.mxu0 0
    %275 = vmatprep.subr.bf16.mxu0 0
    %276 = vmatpush1.bf16.msra.mxu0 0
    %277 = vmatprep.subr.bf16.mxu0 0
    %278 = vmatpush1.bf16.msra.mxu0 0
    %279 = vmatprep.subr.bf16.mxu0 0
    %280 = vmatpush1.bf16.msra.mxu0 0
    %281 = vmatprep.subr.bf16.mxu0 0
    %282 = vmatpush1.bf16.msra.mxu0 0
    %283 = vmatprep.subr.bf16.mxu0 0
    %284 = vmatpush1.bf16.msra.mxu0 0
    %285 = vmatprep.subr.bf16.mxu0 0
    %286 = vmatpush1.bf16.msra.mxu0 0
    %287 = vmatprep.subr.bf16.mxu0 0
    %288 = vmatpush1.bf16.msra.mxu0 0
    %289 = vmatprep.subr.bf16.mxu0 0
    %290 = vmatpush1.bf16.msra.mxu0 0
    %291 = vmatprep.subr.bf16.mxu0 0
    %292 = vmatpush1.bf16.msra.mxu0 0
    %293 = vmatprep.subr.bf16.mxu0 0
    %294 = vmatpush1.bf16.msra.mxu0 0
    %295 = vmatprep.mubr.bf16.mxu0 0
    %296 = vmatmul.mubr.bf16.gmra.mrb[0].mxu0 %v135
    %v297 = vpop.f32.mrb[0].mxu0
    %v298 = vadd.f32 %v250, %v297
    %v299 = vpop.f32.mrb[0].mxu0
    %v300 = vpop.f32.mrb[0].mxu0
    %v301 = vadd.f32 %v250, %v300
    %v302 = vpop.f32.mrb[0].mxu0
    %303 = vdwg.mxu0
    %v304 = vpack.c.bf16 %v301, %v298
    %v305 = vld [vmem:[#allocation2] sm:$0xff]
    %v306 = vld [vmem:[#allocation2 + $0x8] sm:$0xff]
    %vm307 = vcmask 64512
    %v309 = vsel %vm307, %v178, 0
    %v312 = vsel %vm307, %v241, 0
    %314 = vmatprep.subr.bf16.mxu0 0
    %315 = vmatpush1.bf16.xpose.msra.mxu0 %v312
    %316 = vmatprep.subr.bf16.mxu0 0
    %317 = vmatpush1.bf16.xpose.msra.mxu0 0
    %318 = vmatprep.subr.bf16.mxu0 0
    %319 = vmatpush1.bf16.xpose.msra.mxu0 0
    %320 = vmatprep.subr.bf16.mxu0 0
    %321 = vmatpush1.bf16.xpose.msra.mxu0 0
    %322 = vmatprep.subr.bf16.mxu0 0
    %323 = vmatpush1.bf16.xpose.msra.mxu0 0
    %324 = vmatprep.subr.bf16.mxu0 0
    %325 = vmatpush1.bf16.xpose.msra.mxu0 0
    %326 = vmatprep.subr.bf16.mxu0 0
    %327 = vmatpush1.bf16.xpose.msra.mxu0 0
    %328 = vmatprep.subr.bf16.mxu0 0
    %329 = vmatpush1.bf16.xpose.msra.mxu0 0
    %330 = vmatprep.subr.bf16.mxu0 0
    %331 = vmatpush1.bf16.xpose.msra.mxu0 0
    %332 = vmatprep.subr.bf16.mxu0 0
    %333 = vmatpush1.bf16.xpose.msra.mxu0 0
    %334 = vmatprep.subr.bf16.mxu0 0
    %335 = vmatpush1.bf16.xpose.msra.mxu0 0
    %336 = vmatprep.subr.bf16.mxu0 0
    %337 = vmatpush1.bf16.xpose.msra.mxu0 0
    %338 = vmatprep.subr.bf16.mxu0 0
    %339 = vmatpush1.bf16.xpose.msra.mxu0 0
    %340 = vmatprep.subr.bf16.mxu0 0
    %341 = vmatpush1.bf16.xpose.msra.mxu0 0
    %342 = vmatprep.subr.bf16.mxu0 0
    %343 = vmatpush1.bf16.xpose.msra.mxu0 0
    %344 = vmatprep.subr.bf16.mxu0 0
    %345 = vmatpush1.bf16.xpose.msra.mxu0 0
    %346 = vmatprep.mubr.bf16.mxu0 0
    %347 = vmatmul.mubr.bf16.gmra.mrb[0].mxu0 %v309
    %v348 = vpop.f32.mrb[0].mxu0
    %v349 = vadd.f32 %v305, %v348
    %v350 = vpop.f32.mrb[0].mxu0
    %v351 = vpop.f32.mrb[0].mxu0
    %v352 = vadd.f32 %v306, %v351
    %v353 = vpop.f32.mrb[0].mxu0
    %354 = vdwg.mxu0
    %vm355 = vcmask 130048
    %v356 = vsel %vm355, %v349, -inf
    %357 = vmax.xlane.f32.xlu0 %v356
    %v358 = vpop.xlane.xlu0 %357
    %v359 = vsel %vm355, %v352, -inf
    %360 = vmax.xlane.f32.xlu0 %v359
    %v361 = vpop.xlane.xlu0 %360
    %v362 = vsub.f32 %v349, %v358
    %v363 = vsub.f32 %v352, %v361
    %v364 = vmul.f32 %v362, 1.442695
    %v365 = vpow.pop %v364
    %v366 = vmul.f32 %v363, 1.442695
    %v367 = vpow.pop %v366
    %v368 = vsel %vm355, %v365, 0.0
    %369 = vadd.xlane.f32.xlu0 %v368
    %v370 = vpop.xlane.xlu0 %369
    %v371 = vsel %vm355, %v367, 0.0
    %372 = vadd.xlane.f32.xlu0 %v371
    %v373 = vpop.xlane.xlu0 %372
    %v374 = vrcp.pop %v370
    %v375 = vrcp.pop %v373
    %v376 = vmul.f32 %v365, %v374
    %v377 = vmul.f32 %v367, %v375
    %v378 = vpack.c.bf16 %v377, %v376
    %v380 = vsel %vm355, %v378, 0
    %382 = vmatprep.subr.bf16.mxu0 0
    %383 = vmatpush1.bf16.msra.mxu0 %v304
    %384 = vmatprep.subr.bf16.mxu0 0
    %385 = vmatpush1.bf16.msra.mxu0 0
    %386 = vmatprep.subr.bf16.mxu0 0
    %387 = vmatpush1.bf16.msra.mxu0 0
    %388 = vmatprep.subr.bf16.mxu0 0
    %389 = vmatpush1.bf16.msra.mxu0 0
    %390 = vmatprep.subr.bf16.mxu0 0
    %391 = vmatpush1.bf16.msra.mxu0 0
    %392 = vmatprep.subr.bf16.mxu0 0
    %393 = vmatpush1.bf16.msra.mxu0 0
    %394 = vmatprep.subr.bf16.mxu0 0
    %395 = vmatpush1.bf16.msra.mxu0 0
    %396 = vmatprep.subr.bf16.mxu0 0
    %397 = vmatpush1.bf16.msra.mxu0 0
    %398 = vmatprep.subr.bf16.mxu0 0
    %399 = vmatpush1.bf16.msra.mxu0 0
    %400 = vmatprep.subr.bf16.mxu0 0
    %401 = vmatpush1.bf16.msra.mxu0 0
    %402 = vmatprep.subr.bf16.mxu0 0
    %403 = vmatpush1.bf16.msra.mxu0 0
    %404 = vmatprep.subr.bf16.mxu0 0
    %405 = vmatpush1.bf16.msra.mxu0 0
    %406 = vmatprep.subr.bf16.mxu0 0
    %407 = vmatpush1.bf16.msra.mxu0 0
    %408 = vmatprep.subr.bf16.mxu0 0
    %409 = vmatpush1.bf16.msra.mxu0 0
    %410 = vmatprep.subr.bf16.mxu0 0
    %411 = vmatpush1.bf16.msra.mxu0 0
    %412 = vmatprep.subr.bf16.mxu0 0
    %413 = vmatpush1.bf16.msra.mxu0 0
    %414 = vmatprep.mubr.bf16.mxu0 0
    %415 = vmatmul.mubr.bf16.gmra.mrb[0].mxu0 %v380
    %v416 = vpop.f32.mrb[0].mxu0
    %v417 = vadd.f32 0.0, %v416
    %v418 = vpop.f32.mrb[0].mxu0
    %v419 = vpop.f32.mrb[0].mxu0
    %v420 = vadd.f32 0.0, %v419
    %v421 = vpop.f32.mrb[0].mxu0
    %422 = vdwg.mxu0
    %v423 = vpack.c.bf16 %v420, %v417
    %v424 = vld [vmem:[#allocation5] sm:$0xf]
    %426 = vrot.lane.b32.xlu0 %v178, 120
    %v427 = vpop.permute.xlu0 %426
    %429 = vrot.lane.b32.xlu0 %v241, 120
    %v430 = vpop.permute.xlu0 %429
    %v432 = vsel %vm307, %v427, 0
    %v435 = vsel %vm307, %v430, 0
    %437 = vmatprep.subr.bf16.mxu0 0
    %438 = vmatpush1.bf16.xpose.msra.mxu0 %v435
    %439 = vmatprep.subr.bf16.mxu0 0
    %440 = vmatpush1.bf16.xpose.msra.mxu0 0
    %441 = vmatprep.subr.bf16.mxu0 0
    %442 = vmatpush1.bf16.xpose.msra.mxu0 0
    %443 = vmatprep.subr.bf16.mxu0 0
    %444 = vmatpush1.bf16.xpose.msra.mxu0 0
    %445 = vmatprep.subr.bf16.mxu0 0
    %446 = vmatpush1.bf16.xpose.msra.mxu0 0
    %447 = vmatprep.subr.bf16.mxu0 0
    %448 = vmatpush1.bf16.xpose.msra.mxu0 0
    %449 = vmatprep.subr.bf16.mxu0 0
    %450 = vmatpush1.bf16.xpose.msra.mxu0 0
    %451 = vmatprep.subr.bf16.mxu0 0
    %452 = vmatpush1.bf16.xpose.msra.mxu0 0
    %453 = vmatprep.subr.bf16.mxu0 0
    %454 = vmatpush1.bf16.xpose.msra.mxu0 0
    %455 = vmatprep.subr.bf16.mxu0 0
    %456 = vmatpush1.bf16.xpose.msra.mxu0 0
    %457 = vmatprep.subr.bf16.mxu0 0
    %458 = vmatpush1.bf16.xpose.msra.mxu0 0
    %459 = vmatprep.subr.bf16.mxu0 0
    %460 = vmatpush1.bf16.xpose.msra.mxu0 0
    %461 = vmatprep.subr.bf16.mxu0 0
    %462 = vmatpush1.bf16.xpose.msra.mxu0 0
    %463 = vmatprep.subr.bf16.mxu0 0
    %464 = vmatpush1.bf16.xpose.msra.mxu0 0
    %465 = vmatprep.subr.bf16.mxu0 0
    %466 = vmatpush1.bf16.xpose.msra.mxu0 0
    %467 = vmatprep.subr.bf16.mxu0 0
    %468 = vmatpush1.bf16.xpose.msra.mxu0 0
    %469 = vmatprep.mubr.bf16.mxu0 0
    %470 = vmatmul.mubr.bf16.gmra.mrb[0].mxu0 %v432
    %v471 = vpop.f32.mrb[0].mxu0
    %v472 = vadd.f32 %v305, %v471
    %v473 = vpop.f32.mrb[0].mxu0
    %v474 = vpop.f32.mrb[0].mxu0
    %v475 = vadd.f32 %v306, %v474
    %v476 = vpop.f32.mrb[0].mxu0
    %477 = vdwg.mxu0
    %v478 = vsel %vm355, %v472, -inf
    %479 = vmax.xlane.f32.xlu0 %v478
    %v480 = vpop.xlane.xlu0 %479
    %v481 = vsel %vm355, %v475, -inf
    %482 = vmax.xlane.f32.xlu0 %v481
    %v483 = vpop.xlane.xlu0 %482
    %v484 = vsub.f32 %v472, %v480
    %v485 = vsub.f32 %v475, %v483
    %v486 = vmul.f32 %v484, 1.442695
    %v487 = vpow.pop %v486
    %v488 = vmul.f32 %v485, 1.442695
    %v489 = vpow.pop %v488
    %v490 = vsel %vm355, %v487, 0.0
    %491 = vadd.xlane.f32.xlu0 %v490
    %v492 = vpop.xlane.xlu0 %491
    %v493 = vsel %vm355, %v489, 0.0
    %494 = vadd.xlane.f32.xlu0 %v493
    %v495 = vpop.xlane.xlu0 %494
    %v496 = vrcp.pop %v492
    %v497 = vrcp.pop %v495
    %v498 = vmul.f32 %v487, %v496
    %v499 = vmul.f32 %v489, %v497
    %v500 = vpack.c.bf16 %v499, %v498
    %502 = vrot.lane.b32.xlu0 %v304, 120
    %v503 = vpop.permute.xlu0 %502
    %v506 = vsel %vm355, %v500, 0
    %508 = vmatprep.subr.bf16.mxu0 0
    %509 = vmatpush1.bf16.msra.mxu0 %v503
    %510 = vmatprep.subr.bf16.mxu0 0
    %511 = vmatpush1.bf16.msra.mxu0 0
    %512 = vmatprep.subr.bf16.mxu0 0
    %513 = vmatpush1.bf16.msra.mxu0 0
    %514 = vmatprep.subr.bf16.mxu0 0
    %515 = vmatpush1.bf16.msra.mxu0 0
    %516 = vmatprep.subr.bf16.mxu0 0
    %517 = vmatpush1.bf16.msra.mxu0 0
    %518 = vmatprep.subr.bf16.mxu0 0
    %519 = vmatpush1.bf16.msra.mxu0 0
    %520 = vmatprep.subr.bf16.mxu0 0
    %521 = vmatpush1.bf16.msra.mxu0 0
    %522 = vmatprep.subr.bf16.mxu0 0
    %523 = vmatpush1.bf16.msra.mxu0 0
    %524 = vmatprep.subr.bf16.mxu0 0
    %525 = vmatpush1.bf16.msra.mxu0 0
    %526 = vmatprep.subr.bf16.mxu0 0
    %527 = vmatpush1.bf16.msra.mxu0 0
    %528 = vmatprep.subr.bf16.mxu0 0
    %529 = vmatpush1.bf16.msra.mxu0 0
    %530 = vmatprep.subr.bf16.mxu0 0
    %531 = vmatpush1.bf16.msra.mxu0 0
    %532 = vmatprep.subr.bf16.mxu0 0
    %533 = vmatpush1.bf16.msra.mxu0 0
    %534 = vmatprep.subr.bf16.mxu0 0
    %535 = vmatpush1.bf16.msra.mxu0 0
    %536 = vmatprep.subr.bf16.mxu0 0
    %537 = vmatpush1.bf16.msra.mxu0 0
    %538 = vmatprep.subr.bf16.mxu0 0
    %539 = vmatpush1.bf16.msra.mxu0 0
    %540 = vmatprep.mubr.bf16.mxu0 0
    %541 = vmatmul.mubr.bf16.gmra.mrb[0].mxu0 %v506
    %v542 = vpop.f32.mrb[0].mxu0
    %v543 = vadd.f32 0.0, %v542
    %v544 = vpop.f32.mrb[0].mxu0
    %v545 = vpop.f32.mrb[0].mxu0
    %v546 = vadd.f32 0.0, %v545
    %v547 = vpop.f32.mrb[0].mxu0
    %548 = vdwg.mxu0
    %v549 = vpack.c.bf16 %v546, %v543
    %s550 = scalar_lea.vmem [#allocation5], 4
    %v551 = vld [vmem:[%s550] sm:$0xf]
    %v553 = vsel %vm307, %v549, 0
    %vm555 = vcmask 1043456
    %v557 = vsel %vm555, %v551, 0
    %559 = vmatprep.subr.bf16.mxu0 0
    %560 = vmatpush1.bf16.msra.mxu0 %v557
    %561 = vmatprep.subr.bf16.mxu0 0
    %562 = vmatpush1.bf16.msra.mxu0 0
    %563 = vmatprep.subr.bf16.mxu0 0
    %564 = vmatpush1.bf16.msra.mxu0 0
    %565 = vmatprep.subr.bf16.mxu0 0
    %566 = vmatpush1.bf16.msra.mxu0 0
    %567 = vmatprep.subr.bf16.mxu0 0
    %568 = vmatpush1.bf16.msra.mxu0 0
    %569 = vmatprep.subr.bf16.mxu0 0
    %570 = vmatpush1.bf16.msra.mxu0 0
    %571 = vmatprep.subr.bf16.mxu0 0
    %572 = vmatpush1.bf16.msra.mxu0 0
    %573 = vmatprep.subr.bf16.mxu0 0
    %574 = vmatpush1.bf16.msra.mxu0 0
    %575 = vmatprep.subr.bf16.mxu0 0
    %576 = vmatpush1.bf16.msra.mxu0 0
    %577 = vmatprep.subr.bf16.mxu0 0
    %578 = vmatpush1.bf16.msra.mxu0 0
    %579 = vmatprep.subr.bf16.mxu0 0
    %580 = vmatpush1.bf16.msra.mxu0 0
    %581 = vmatprep.subr.bf16.mxu0 0
    %582 = vmatpush1.bf16.msra.mxu0 0
    %583 = vmatprep.subr.bf16.mxu0 0
    %584 = vmatpush1.bf16.msra.mxu0 0
    %585 = vmatprep.subr.bf16.mxu0 0
    %586 = vmatpush1.bf16.msra.mxu0 0
    %587 = vmatprep.subr.bf16.mxu0 0
    %588 = vmatpush1.bf16.msra.mxu0 0
    %589 = vmatprep.subr.bf16.mxu0 0
    %590 = vmatpush1.bf16.msra.mxu0 0
    %591 = vmatprep.mubr.bf16.mxu0 0
    %592 = vmatmul.mubr.bf16.gmra.mrb[0].mxu0 %v553
    %v593 = vpop.f32.mrb[0].mxu0
    %v594 = vadd.f32 0.0, %v593
    %v595 = vpop.f32.mrb[0].mxu0
    %v596 = vpop.f32.mrb[0].mxu0
    %v597 = vadd.f32 0.0, %v596
    %v598 = vpop.f32.mrb[0].mxu0
    %599 = vdwg.mxu0
    %v601 = vsel %vm307, %v423, 0
    %v604 = vsel %vm555, %v424, 0
    %606 = vmatprep.subr.bf16.mxu0 0
    %607 = vmatpush1.bf16.msra.mxu0 %v604
    %608 = vmatprep.subr.bf16.mxu0 0
    %609 = vmatpush1.bf16.msra.mxu0 0
    %610 = vmatprep.subr.bf16.mxu0 0
    %611 = vmatpush1.bf16.msra.mxu0 0
    %612 = vmatprep.subr.bf16.mxu0 0
    %613 = vmatpush1.bf16.msra.mxu0 0
    %614 = vmatprep.subr.bf16.mxu0 0
    %615 = vmatpush1.bf16.msra.mxu0 0
    %616 = vmatprep.subr.bf16.mxu0 0
    %617 = vmatpush1.bf16.msra.mxu0 0
    %618 = vmatprep.subr.bf16.mxu0 0
    %619 = vmatpush1.bf16.msra.mxu0 0
    %620 = vmatprep.subr.bf16.mxu0 0
    %621 = vmatpush1.bf16.msra.mxu0 0
    %622 = vmatprep.subr.bf16.mxu0 0
    %623 = vmatpush1.bf16.msra.mxu0 0
    %624 = vmatprep.subr.bf16.mxu0 0
    %625 = vmatpush1.bf16.msra.mxu0 0
    %626 = vmatprep.subr.bf16.mxu0 0
    %627 = vmatpush1.bf16.msra.mxu0 0
    %628 = vmatprep.subr.bf16.mxu0 0
    %629 = vmatpush1.bf16.msra.mxu0 0
    %630 = vmatprep.subr.bf16.mxu0 0
    %631 = vmatpush1.bf16.msra.mxu0 0
    %632 = vmatprep.subr.bf16.mxu0 0
    %633 = vmatpush1.bf16.msra.mxu0 0
    %634 = vmatprep.subr.bf16.mxu0 0
    %635 = vmatpush1.bf16.msra.mxu0 0
    %636 = vmatprep.subr.bf16.mxu0 0
    %637 = vmatpush1.bf16.msra.mxu0 0
    %638 = vmatprep.mubr.bf16.mxu0 0
    %639 = vmatmul.mubr.bf16.gmra.mrb[0].mxu0 %v601
    %v640 = vpop.f32.mrb[0].mxu0
    %v641 = vadd.f32 %v594, %v640
    %v642 = vpop.f32.mrb[0].mxu0
    %v643 = vpop.f32.mrb[0].mxu0
    %v644 = vadd.f32 %v597, %v643
    %v645 = vpop.f32.mrb[0].mxu0
    %646 = vdwg.mxu0
    %647 = vrot.lane.b32.xlu0 %v178, 112
    %v648 = vpop.permute.xlu0 %647
    %649 = vrot.lane.b32.xlu0 %v241, 112
    %v650 = vpop.permute.xlu0 %649
    %v652 = vsel %vm307, %v648, 0
    %v655 = vsel %vm307, %v650, 0
    %657 = vmatprep.subr.bf16.mxu0 0
    %658 = vmatpush1.bf16.xpose.msra.mxu0 %v655
    %659 = vmatprep.subr.bf16.mxu0 0
    %660 = vmatpush1.bf16.xpose.msra.mxu0 0
    %661 = vmatprep.subr.bf16.mxu0 0
    %662 = vmatpush1.bf16.xpose.msra.mxu0 0
    %663 = vmatprep.subr.bf16.mxu0 0
    %664 = vmatpush1.bf16.xpose.msra.mxu0 0
    %665 = vmatprep.subr.bf16.mxu0 0
    %666 = vmatpush1.bf16.xpose.msra.mxu0 0
    %667 = vmatprep.subr.bf16.mxu0 0
    %668 = vmatpush1.bf16.xpose.msra.mxu0 0
    %669 = vmatprep.subr.bf16.mxu0 0
    %670 = vmatpush1.bf16.xpose.msra.mxu0 0
    %671 = vmatprep.subr.bf16.mxu0 0
    %672 = vmatpush1.bf16.xpose.msra.mxu0 0
    %673 = vmatprep.subr.bf16.mxu0 0
    %674 = vmatpush1.bf16.xpose.msra.mxu0 0
    %675 = vmatprep.subr.bf16.mxu0 0
    %676 = vmatpush1.bf16.xpose.msra.mxu0 0
    %677 = vmatprep.subr.bf16.mxu0 0
    %678 = vmatpush1.bf16.xpose.msra.mxu0 0
    %679 = vmatprep.subr.bf16.mxu0 0
    %680 = vmatpush1.bf16.xpose.msra.mxu0 0
    %681 = vmatprep.subr.bf16.mxu0 0
    %682 = vmatpush1.bf16.xpose.msra.mxu0 0
    %683 = vmatprep.subr.bf16.mxu0 0
    %684 = vmatpush1.bf16.xpose.msra.mxu0 0
    %685 = vmatprep.subr.bf16.mxu0 0
    %686 = vmatpush1.bf16.xpose.msra.mxu0 0
    %687 = vmatprep.subr.bf16.mxu0 0
    %688 = vmatpush1.bf16.xpose.msra.mxu0 0
    %689 = vmatprep.mubr.bf16.mxu0 0
    %690 = vmatmul.mubr.bf16.gmra.mrb[0].mxu0 %v652
    %v691 = vpop.f32.mrb[0].mxu0
    %v692 = vadd.f32 %v305, %v691
    %v693 = vpop.f32.mrb[0].mxu0
    %v694 = vpop.f32.mrb[0].mxu0
    %v695 = vadd.f32 %v306, %v694
    %v696 = vpop.f32.mrb[0].mxu0
    %697 = vdwg.mxu0
    %v698 = vsel %vm355, %v692, -inf
    %699 = vmax.xlane.f32.xlu0 %v698
    %v700 = vpop.xlane.xlu0 %699
    %v701 = vsel %vm355, %v695, -inf
    %702 = vmax.xlane.f32.xlu0 %v701
    %v703 = vpop.xlane.xlu0 %702
    %v704 = vsub.f32 %v692, %v700
    %v705 = vsub.f32 %v695, %v703
    %v706 = vmul.f32 %v704, 1.442695
    %v707 = vpow.pop %v706
    %v708 = vmul.f32 %v705, 1.442695
    %v709 = vpow.pop %v708
    %v710 = vsel %vm355, %v707, 0.0
    %711 = vadd.xlane.f32.xlu0 %v710
    %v712 = vpop.xlane.xlu0 %711
    %v713 = vsel %vm355, %v709, 0.0
    %714 = vadd.xlane.f32.xlu0 %v713
    %v715 = vpop.xlane.xlu0 %714
    %v716 = vrcp.pop %v712
    %v717 = vrcp.pop %v715
    %v718 = vmul.f32 %v707, %v716
    %v719 = vmul.f32 %v709, %v717
    %v720 = vpack.c.bf16 %v719, %v718
    %721 = vrot.lane.b32.xlu0 %v304, 112
    %v722 = vpop.permute.xlu0 %721
    %v725 = vsel %vm355, %v720, 0
    %727 = vmatprep.subr.bf16.mxu0 0
    %728 = vmatpush1.bf16.msra.mxu0 %v722
    %729 = vmatprep.subr.bf16.mxu0 0
    %730 = vmatpush1.bf16.msra.mxu0 0
    %731 = vmatprep.subr.bf16.mxu0 0
    %732 = vmatpush1.bf16.msra.mxu0 0
    %733 = vmatprep.subr.bf16.mxu0 0
    %734 = vmatpush1.bf16.msra.mxu0 0
    %735 = vmatprep.subr.bf16.mxu0 0
    %736 = vmatpush1.bf16.msra.mxu0 0
    %737 = vmatprep.subr.bf16.mxu0 0
    %738 = vmatpush1.bf16.msra.mxu0 0
    %739 = vmatprep.subr.bf16.mxu0 0
    %740 = vmatpush1.bf16.msra.mxu0 0
    %741 = vmatprep.subr.bf16.mxu0 0
    %742 = vmatpush1.bf16.msra.mxu0 0
    %743 = vmatprep.subr.bf16.mxu0 0
    %744 = vmatpush1.bf16.msra.mxu0 0
    %745 = vmatprep.subr.bf16.mxu0 0
    %746 = vmatpush1.bf16.msra.mxu0 0
    %747 = vmatprep.subr.bf16.mxu0 0
    %748 = vmatpush1.bf16.msra.mxu0 0
    %749 = vmatprep.subr.bf16.mxu0 0
    %750 = vmatpush1.bf16.msra.mxu0 0
    %751 = vmatprep.subr.bf16.mxu0 0
    %752 = vmatpush1.bf16.msra.mxu0 0
    %753 = vmatprep.subr.bf16.mxu0 0
    %754 = vmatpush1.bf16.msra.mxu0 0
    %755 = vmatprep.subr.bf16.mxu0 0
    %756 = vmatpush1.bf16.msra.mxu0 0
    %757 = vmatprep.subr.bf16.mxu0 0
    %758 = vmatpush1.bf16.msra.mxu0 0
    %759 = vmatprep.mubr.bf16.mxu0 0
    %760 = vmatmul.mubr.bf16.gmra.mrb[0].mxu0 %v725
    %v761 = vpop.f32.mrb[0].mxu0
    %v762 = vadd.f32 0.0, %v761
    %v763 = vpop.f32.mrb[0].mxu0
    %v764 = vpop.f32.mrb[0].mxu0
    %v765 = vadd.f32 0.0, %v764
    %v766 = vpop.f32.mrb[0].mxu0
    %767 = vdwg.mxu0
    %v768 = vpack.c.bf16 %v765, %v762
    %s769 = scalar_lea.vmem [#allocation5], 8
    %v770 = vld [vmem:[%s769] sm:$0xf]
    %v772 = vsel %vm307, %v768, 0
    %v775 = vsel %vm555, %v770, 0
    %777 = vmatprep.subr.bf16.mxu0 0
    %778 = vmatpush1.bf16.msra.mxu0 %v775
    %779 = vmatprep.subr.bf16.mxu0 0
    %780 = vmatpush1.bf16.msra.mxu0 0
    %781 = vmatprep.subr.bf16.mxu0 0
    %782 = vmatpush1.bf16.msra.mxu0 0
    %783 = vmatprep.subr.bf16.mxu0 0
    %784 = vmatpush1.bf16.msra.mxu0 0
    %785 = vmatprep.subr.bf16.mxu0 0
    %786 = vmatpush1.bf16.msra.mxu0 0
    %787 = vmatprep.subr.bf16.mxu0 0
    %788 = vmatpush1.bf16.msra.mxu0 0
    %789 = vmatprep.subr.bf16.mxu0 0
    %790 = vmatpush1.bf16.msra.mxu0 0
    %791 = vmatprep.subr.bf16.mxu0 0
    %792 = vmatpush1.bf16.msra.mxu0 0
    %793 = vmatprep.subr.bf16.mxu0 0
    %794 = vmatpush1.bf16.msra.mxu0 0
    %795 = vmatprep.subr.bf16.mxu0 0
    %796 = vmatpush1.bf16.msra.mxu0 0
    %797 = vmatprep.subr.bf16.mxu0 0
    %798 = vmatpush1.bf16.msra.mxu0 0
    %799 = vmatprep.subr.bf16.mxu0 0
    %800 = vmatpush1.bf16.msra.mxu0 0
    %801 = vmatprep.subr.bf16.mxu0 0
    %802 = vmatpush1.bf16.msra.mxu0 0
    %803 = vmatprep.subr.bf16.mxu0 0
    %804 = vmatpush1.bf16.msra.mxu0 0
    %805 = vmatprep.subr.bf16.mxu0 0
    %806 = vmatpush1.bf16.msra.mxu0 0
    %807 = vmatprep.subr.bf16.mxu0 0
    %808 = vmatpush1.bf16.msra.mxu0 0
    %809 = vmatprep.mubr.bf16.mxu0 0
    %810 = vmatmul.mubr.bf16.gmra.mrb[0].mxu0 %v772
    %v811 = vpop.f32.mrb[0].mxu0
    %v812 = vadd.f32 0.0, %v811
    %v813 = vpop.f32.mrb[0].mxu0
    %v814 = vpop.f32.mrb[0].mxu0
    %v815 = vadd.f32 0.0, %v814
    %v816 = vpop.f32.mrb[0].mxu0
    %817 = vdwg.mxu0
    %v818 = vadd.f32 %v641, %v812
    %v819 = vadd.f32 %v644, %v815
    %820 = vrot.lane.b32.xlu0 %v178, 104
    %v821 = vpop.permute.xlu0 %820
    %822 = vrot.lane.b32.xlu0 %v241, 104
    %v823 = vpop.permute.xlu0 %822
    %v825 = vsel %vm307, %v821, 0
    %v828 = vsel %vm307, %v823, 0
    %830 = vmatprep.subr.bf16.mxu0 0
    %831 = vmatpush1.bf16.xpose.msra.mxu0 %v828
    %832 = vmatprep.subr.bf16.mxu0 0
    %833 = vmatpush1.bf16.xpose.msra.mxu0 0
    %834 = vmatprep.subr.bf16.mxu0 0
    %835 = vmatpush1.bf16.xpose.msra.mxu0 0
    %836 = vmatprep.subr.bf16.mxu0 0
    %837 = vmatpush1.bf16.xpose.msra.mxu0 0
    %838 = vmatprep.subr.bf16.mxu0 0
    %839 = vmatpush1.bf16.xpose.msra.mxu0 0
    %840 = vmatprep.subr.bf16.mxu0 0
    %841 = vmatpush1.bf16.xpose.msra.mxu0 0
    %842 = vmatprep.subr.bf16.mxu0 0
    %843 = vmatpush1.bf16.xpose.msra.mxu0 0
    %844 = vmatprep.subr.bf16.mxu0 0
    %845 = vmatpush1.bf16.xpose.msra.mxu0 0
    %846 = vmatprep.subr.bf16.mxu0 0
    %847 = vmatpush1.bf16.xpose.msra.mxu0 0
    %848 = vmatprep.subr.bf16.mxu0 0
    %849 = vmatpush1.bf16.xpose.msra.mxu0 0
    %850 = vmatprep.subr.bf16.mxu0 0
    %851 = vmatpush1.bf16.xpose.msra.mxu0 0
    %852 = vmatprep.subr.bf16.mxu0 0
    %853 = vmatpush1.bf16.xpose.msra.mxu0 0
    %854 = vmatprep.subr.bf16.mxu0 0
    %855 = vmatpush1.bf16.xpose.msra.mxu0 0
    %856 = vmatprep.subr.bf16.mxu0 0
    %857 = vmatpush1.bf16.xpose.msra.mxu0 0
    %858 = vmatprep.subr.bf16.mxu0 0
    %859 = vmatpush1.bf16.xpose.msra.mxu0 0
    %860 = vmatprep.subr.bf16.mxu0 0
    %861 = vmatpush1.bf16.xpose.msra.mxu0 0
    %862 = vmatprep.mubr.bf16.mxu0 0
    %863 = vmatmul.mubr.bf16.gmra.mrb[0].mxu0 %v825
    %v864 = vpop.f32.mrb[0].mxu0
    %v865 = vadd.f32 %v305, %v864
    %v866 = vpop.f32.mrb[0].mxu0
    %v867 = vpop.f32.mrb[0].mxu0
    %v868 = vadd.f32 %v306, %v867
    %v869 = vpop.f32.mrb[0].mxu0
    %870 = vdwg.mxu0
    %v871 = vsel %vm355, %v865, -inf
    %872 = vmax.xlane.f32.xlu0 %v871
    %v873 = vpop.xlane.xlu0 %872
    %v874 = vsel %vm355, %v868, -inf
    %875 = vmax.xlane.f32.xlu0 %v874
    %v876 = vpop.xlane.xlu0 %875
    %v877 = vsub.f32 %v865, %v873
    %v878 = vsub.f32 %v868, %v876
    %v879 = vmul.f32 %v877, 1.442695
    %v880 = vpow.pop %v879
    %v881 = vmul.f32 %v878, 1.442695
    %v882 = vpow.pop %v881
    %v883 = vsel %vm355, %v880, 0.0
    %884 = vadd.xlane.f32.xlu0 %v883
    %v885 = vpop.xlane.xlu0 %884
    %v886 = vsel %vm355, %v882, 0.0
    %887 = vadd.xlane.f32.xlu0 %v886
    %v888 = vpop.xlane.xlu0 %887
    %v889 = vrcp.pop %v885
    %v890 = vrcp.pop %v888
    %v891 = vmul.f32 %v880, %v889
    %v892 = vmul.f32 %v882, %v890
    %v893 = vpack.c.bf16 %v892, %v891
    %894 = vrot.lane.b32.xlu0 %v304, 104
    %v895 = vpop.permute.xlu0 %894
    %v898 = vsel %vm355, %v893, 0
    %900 = vmatprep.subr.bf16.mxu0 0
    %901 = vmatpush1.bf16.msra.mxu0 %v895
    %902 = vmatprep.subr.bf16.mxu0 0
    %903 = vmatpush1.bf16.msra.mxu0 0
    %904 = vmatprep.subr.bf16.mxu0 0
    %905 = vmatpush1.bf16.msra.mxu0 0
    %906 = vmatprep.subr.bf16.mxu0 0
    %907 = vmatpush1.bf16.msra.mxu0 0
    %908 = vmatprep.subr.bf16.mxu0 0
    %909 = vmatpush1.bf16.msra.mxu0 0
    %910 = vmatprep.subr.bf16.mxu0 0
    %911 = vmatpush1.bf16.msra.mxu0 0
    %912 = vmatprep.subr.bf16.mxu0 0
    %913 = vmatpush1.bf16.msra.mxu0 0
    %914 = vmatprep.subr.bf16.mxu0 0
    %915 = vmatpush1.bf16.msra.mxu0 0
    %916 = vmatprep.subr.bf16.mxu0 0
    %917 = vmatpush1.bf16.msra.mxu0 0
    %918 = vmatprep.subr.bf16.mxu0 0
    %919 = vmatpush1.bf16.msra.mxu0 0
    %920 = vmatprep.subr.bf16.mxu0 0
    %921 = vmatpush1.bf16.msra.mxu0 0
    %922 = vmatprep.subr.bf16.mxu0 0
    %923 = vmatpush1.bf16.msra.mxu0 0
    %924 = vmatprep.subr.bf16.mxu0 0
    %925 = vmatpush1.bf16.msra.mxu0 0
    %926 = vmatprep.subr.bf16.mxu0 0
    %927 = vmatpush1.bf16.msra.mxu0 0
    %928 = vmatprep.subr.bf16.mxu0 0
    %929 = vmatpush1.bf16.msra.mxu0 0
    %930 = vmatprep.subr.bf16.mxu0 0
    %931 = vmatpush1.bf16.msra.mxu0 0
    %932 = vmatprep.mubr.bf16.mxu0 0
    %933 = vmatmul.mubr.bf16.gmra.mrb[0].mxu0 %v898
    %v934 = vpop.f32.mrb[0].mxu0
    %v935 = vadd.f32 0.0, %v934
    %v936 = vpop.f32.mrb[0].mxu0
    %v937 = vpop.f32.mrb[0].mxu0
    %v938 = vadd.f32 0.0, %v937
    %v939 = vpop.f32.mrb[0].mxu0
    %940 = vdwg.mxu0
    %v941 = vpack.c.bf16 %v938, %v935
    %s942 = scalar_lea.vmem [#allocation5], 12
    %v943 = vld [vmem:[%s942] sm:$0xf]
    %v945 = vsel %vm307, %v941, 0
    %v948 = vsel %vm555, %v943, 0
    %950 = vmatprep.subr.bf16.mxu0 0
    %951 = vmatpush1.bf16.msra.mxu0 %v948
    %952 = vmatprep.subr.bf16.mxu0 0
    %953 = vmatpush1.bf16.msra.mxu0 0
    %954 = vmatprep.subr.bf16.mxu0 0
    %955 = vmatpush1.bf16.msra.mxu0 0
    %956 = vmatprep.subr.bf16.mxu0 0
    %957 = vmatpush1.bf16.msra.mxu0 0
    %958 = vmatprep.subr.bf16.mxu0 0
    %959 = vmatpush1.bf16.msra.mxu0 0
    %960 = vmatprep.subr.bf16.mxu0 0
    %961 = vmatpush1.bf16.msra.mxu0 0
    %962 = vmatprep.subr.bf16.mxu0 0
    %963 = vmatpush1.bf16.msra.mxu0 0
    %964 = vmatprep.subr.bf16.mxu0 0
    %965 = vmatpush1.bf16.msra.mxu0 0
    %966 = vmatprep.subr.bf16.mxu0 0
    %967 = vmatpush1.bf16.msra.mxu0 0
    %968 = vmatprep.subr.bf16.mxu0 0
    %969 = vmatpush1.bf16.msra.mxu0 0
    %970 = vmatprep.subr.bf16.mxu0 0
    %971 = vmatpush1.bf16.msra.mxu0 0
    %972 = vmatprep.subr.bf16.mxu0 0
    %973 = vmatpush1.bf16.msra.mxu0 0
    %974 = vmatprep.subr.bf16.mxu0 0
    %975 = vmatpush1.bf16.msra.mxu0 0
    %976 = vmatprep.subr.bf16.mxu0 0
    %977 = vmatpush1.bf16.msra.mxu0 0
    %978 = vmatprep.subr.bf16.mxu0 0
    %979 = vmatpush1.bf16.msra.mxu0 0
    %980 = vmatprep.subr.bf16.mxu0 0
    %981 = vmatpush1.bf16.msra.mxu0 0
    %982 = vmatprep.mubr.bf16.mxu0 0
    %983 = vmatmul.mubr.bf16.gmra.mrb[0].mxu0 %v945
    %v984 = vpop.f32.mrb[0].mxu0
    %v985 = vadd.f32 0.0, %v984
    %v986 = vpop.f32.mrb[0].mxu0
    %v987 = vpop.f32.mrb[0].mxu0
    %v988 = vadd.f32 0.0, %v987
    %v989 = vpop.f32.mrb[0].mxu0
    %990 = vdwg.mxu0
    %v991 = vadd.f32 %v818, %v985
    %v992 = vadd.f32 %v819, %v988
    %v993 = vadd.f32 %v69, %v991
    %v994 = vadd.f32 %v70, %v992
    %v995 = vlaneseq
    %v996 = vshrl.u32 %v995, 7
    %v997 = vsub.s32 7, %v996
    %v998 = vrot.slane %v71, %v997
    %v999 = vadd.f32 %v993, %v998
    %v1000 = vadd.f32 %v994, %v998
    %v1001 = vsel %vm73, %v999, 0.0
    %1002 = vadd.xlane.f32.xlu0 %v1001
    %v1003 = vpop.xlane.xlu0 %1002
    %v1004 = vsel %vm73, %v1000, 0.0
    %1005 = vadd.xlane.f32.xlu0 %v1004
    %v1006 = vpop.xlane.xlu0 %1005
    %v1007 = vmul.f32 %v1003, %v80
    %v1008 = vmul.f32 %v1006, %v80
    %v1009 = vsub.f32 %v999, %v1007
    %v1010 = vsub.f32 %v1000, %v1008
    %v1011 = vmul.f32 %v1009, %v1009
    %v1012 = vmul.f32 %v1010, %v1010
    %v1013 = vsel %vm73, %v1011, 0.0
    %1014 = vadd.xlane.f32.xlu0 %v1013
    %v1015 = vpop.xlane.xlu0 %1014
    %v1016 = vsel %vm73, %v1012, 0.0
    %1017 = vadd.xlane.f32.xlu0 %v1016
    %v1018 = vpop.xlane.xlu0 %1017
    %v1019 = vmul.f32 %v1015, %v80
    %v1020 = vmul.f32 %v1018, %v80
    %v1021 = vadd.f32 %v1019, 1e-05
    %v1022 = vadd.f32 %v1020, 1e-05
    %v1023 = vrsqrt.pop %v1021
    %v1024 = vrsqrt.pop %v1022
    %v1025 = vmul.f32 %v1009, %v1023
    %v1026 = vmul.f32 %v1010, %v1024
    %v1027 = vlaneseq
    %v1028 = vshrl.u32 %v1027, 7
    %v1029 = vsub.s32 2, %v1028
    %v1030 = vrot.slane %v71, %v1029
    %v1031 = vmul.f32 %v1025, %v1030
    %v1032 = vmul.f32 %v1026, %v1030
    %v1033 = vlaneseq
    %v1034 = vshrl.u32 %v1033, 7
    %v1035 = vsub.s32 3, %v1034
    %v1036 = vrot.slane %v71, %v1035
    %v1037 = vadd.f32 %v1031, %v1036
    %v1038 = vadd.f32 %v1032, %v1036
    %v1039 = vpack.c.bf16 %v1038, %v1037
    %v1040 = vld [vmem:[#allocation7] sm:$0xf]
    %v1041 = vld [vmem:[#allocation7 + $0x4] sm:$0xf]
    %v1042 = vld [vmem:[#allocation7 + $0x8] sm:$0xf]
    %v1043 = vld [vmem:[#allocation7 + $0xc] sm:$0xf]
    %v1044 = vlaneseq
    %v1045 = vshrl.u32 %v1044, 7
    %v1046 = vsub.s32 0, %v1045
    %v1047 = vrot.slane %v72, %v1046
    %v1052 = vunpack.c.l.b16 %v1040
    %v1053 = vunpack.c.l.b16 %v1041
    %v1054 = vunpack.c.l.b16 %v1042
    %v1055 = vunpack.c.l.b16 %v1043
    %v1056 = vpack.c.b16 %v1053, %v1052
    %v1057 = vpack.c.b16 %v1055, %v1054
    %v1061 = vsel %vm73, %v1039, 0
    %1063 = vmatprep.subr.bf16.mxu0 0
    %1064 = vmatpush1.bf16.msra.mxu0 %v1056
    %1065 = vmatprep.subr.bf16.mxu0 0
    %1066 = vmatpush1.bf16.msra.mxu0 %v1057
    %1067 = vmatprep.subr.bf16.mxu0 0
    %1068 = vmatpush1.bf16.msra.mxu0 0
    %1069 = vmatprep.subr.bf16.mxu0 0
    %1070 = vmatpush1.bf16.msra.mxu0 0
    %1071 = vmatprep.subr.bf16.mxu0 0
    %1072 = vmatpush1.bf16.msra.mxu0 0
    %1073 = vmatprep.subr.bf16.mxu0 0
    %1074 = vmatpush1.bf16.msra.mxu0 0
    %1075 = vmatprep.subr.bf16.mxu0 0
    %1076 = vmatpush1.bf16.msra.mxu0 0
    %1077 = vmatprep.subr.bf16.mxu0 0
    %1078 = vmatpush1.bf16.msra.mxu0 0
    %1079 = vmatprep.subr.bf16.mxu0 0
    %1080 = vmatpush1.bf16.msra.mxu0 0
    %1081 = vmatprep.subr.bf16.mxu0 0
    %1082 = vmatpush1.bf16.msra.mxu0 0
    %1083 = vmatprep.subr.bf16.mxu0 0
    %1084 = vmatpush1.bf16.msra.mxu0 0
    %1085 = vmatprep.subr.bf16.mxu0 0
    %1086 = vmatpush1.bf16.msra.mxu0 0
    %1087 = vmatprep.subr.bf16.mxu0 0
    %1088 = vmatpush1.bf16.msra.mxu0 0
    %1089 = vmatprep.subr.bf16.mxu0 0
    %1090 = vmatpush1.bf16.msra.mxu0 0
    %1091 = vmatprep.subr.bf16.mxu0 0
    %1092 = vmatpush1.bf16.msra.mxu0 0
    %1093 = vmatprep.subr.bf16.mxu0 0
    %1094 = vmatpush1.bf16.msra.mxu0 0
    %1095 = vmatprep.mubr.bf16.mxu0 0
    %1096 = vmatmul.mubr.bf16.gmra.mrb[0].mxu0 %v1061
    %v1097 = vpop.f32.mrb[0].mxu0
    %v1098 = vadd.f32 %v1047, %v1097
    %v1099 = vpop.f32.mrb[0].mxu0
    %v1100 = vpop.f32.mrb[0].mxu0
    %v1101 = vadd.f32 %v1047, %v1100
    %v1102 = vpop.f32.mrb[0].mxu0
    %1103 = vdwg.mxu0
    %v1104 = vmul.f32 %v1098, %v1098
    %v1105 = vmul.f32 %v1101, %v1101
    %v1106 = vmul.f32 %v1098, %v1104
    %v1107 = vmul.f32 %v1101, %v1105
    %v1108 = vmul.f32 %v1106, 0.044715
    %v1109 = vmul.f32 %v1107, 0.044715
    %v1110 = vadd.f32 %v1098, %v1108
    %v1111 = vadd.f32 %v1101, %v1109
    %v1112 = vmul.f32 %v1110, 0.7978846
    %v1113 = vmul.f32 %v1111, 0.7978846
    %v1114 = vtanh.pop %v1112
    %v1115 = vtanh.pop %v1113
    %v1116 = vadd.f32 %v1114, 1.0
    %v1117 = vadd.f32 %v1115, 1.0
    %v1118 = vmul.f32 %v1116, 0.5
    %v1119 = vmul.f32 %v1117, 0.5
    %v1120 = vmul.f32 %v1098, %v1118
    %v1121 = vmul.f32 %v1101, %v1119
    %v1122 = vpack.c.bf16 %v1121, %v1120
    %v1123 = vld [vmem:[%s6] sm:$0xf]
    %v1124 = vld [vmem:[%s6 + $0x4] sm:$0xf]
    %v1125 = vld [vmem:[%s6 + $0x8] sm:$0xf]
    %v1126 = vld [vmem:[%s6 + $0xc] sm:$0xf]
    %v1127 = vld [vmem:[%s6 + $0x10] sm:$0xf]
    %v1128 = vld [vmem:[%s6 + $0x14] sm:$0xf]
    %v1129 = vld [vmem:[%s6 + $0x18] sm:$0xf]
    %v1130 = vld [vmem:[%s6 + $0x1c] sm:$0xf]
    %v1131 = vld [vmem:[%s6 + $0x20] sm:$0xf]
    %v1132 = vld [vmem:[%s6 + $0x24] sm:$0xf]
    %v1133 = vld [vmem:[%s6 + $0x28] sm:$0xf]
    %v1134 = vld [vmem:[%s6 + $0x2c] sm:$0xf]
    %v1135 = vld [vmem:[%s6 + $0x30] sm:$0xf]
    %v1136 = vld [vmem:[%s6 + $0x34] sm:$0xf]
    %v1137 = vld [vmem:[%s6 + $0x38] sm:$0xf]
    %v1138 = vld [vmem:[%s6 + $0x3c] sm:$0xf]
    %v1139 = vlaneseq
    %v1140 = vshrl.u32 %v1139, 7
    %v1141 = vsub.s32 1, %v1140
    %v1142 = vrot.slane %v72, %v1141
    %v1159 = vunpack.c.l.b16 %v1123
    %v1160 = vunpack.c.l.b16 %v1124
    %v1161 = vunpack.c.l.b16 %v1125
    %v1162 = vunpack.c.l.b16 %v1126
    %v1163 = vunpack.c.l.b16 %v1127
    %v1164 = vunpack.c.l.b16 %v1128
    %v1165 = vunpack.c.l.b16 %v1129
    %v1166 = vunpack.c.l.b16 %v1130
    %v1167 = vunpack.c.l.b16 %v1131
    %v1168 = vunpack.c.l.b16 %v1132
    %v1169 = vunpack.c.l.b16 %v1133
    %v1170 = vunpack.c.l.b16 %v1134
    %v1171 = vunpack.c.l.b16 %v1135
    %v1172 = vunpack.c.l.b16 %v1136
    %v1173 = vunpack.c.l.b16 %v1137
    %v1174 = vunpack.c.l.b16 %v1138
    %v1175 = vpack.c.b16 %v1160, %v1159
    %v1176 = vpack.c.b16 %v1162, %v1161
    %v1177 = vpack.c.b16 %v1164, %v1163
    %v1178 = vpack.c.b16 %v1166, %v1165
    %v1179 = vpack.c.b16 %v1168, %v1167
    %v1180 = vpack.c.b16 %v1170, %v1169
    %v1181 = vpack.c.b16 %v1172, %v1171
    %v1182 = vpack.c.b16 %v1174, %v1173
    %1191 = vmatprep.subr.bf16.mxu0 0
    %1192 = vmatpush1.bf16.msra.mxu0 %v1175
    %1193 = vmatprep.subr.bf16.mxu0 0
    %1194 = vmatpush1.bf16.msra.mxu0 %v1176
    %1195 = vmatprep.subr.bf16.mxu0 0
    %1196 = vmatpush1.bf16.msra.mxu0 %v1177
    %1197 = vmatprep.subr.bf16.mxu0 0
    %1198 = vmatpush1.bf16.msra.mxu0 %v1178
    %1199 = vmatprep.subr.bf16.mxu0 0
    %1200 = vmatpush1.bf16.msra.mxu0 %v1179
    %1201 = vmatprep.subr.bf16.mxu0 0
    %1202 = vmatpush1.bf16.msra.mxu0 %v1180
    %1203 = vmatprep.subr.bf16.mxu0 0
    %1204 = vmatpush1.bf16.msra.mxu0 %v1181
    %1205 = vmatprep.subr.bf16.mxu0 0
    %1206 = vmatpush1.bf16.msra.mxu0 %v1182
    %1207 = vmatprep.subr.bf16.mxu0 0
    %1208 = vmatpush1.bf16.msra.mxu0 0
    %1209 = vmatprep.subr.bf16.mxu0 0
    %1210 = vmatpush1.bf16.msra.mxu0 0
    %1211 = vmatprep.subr.bf16.mxu0 0
    %1212 = vmatpush1.bf16.msra.mxu0 0
    %1213 = vmatprep.subr.bf16.mxu0 0
    %1214 = vmatpush1.bf16.msra.mxu0 0
    %1215 = vmatprep.subr.bf16.mxu0 0
    %1216 = vmatpush1.bf16.msra.mxu0 0
    %1217 = vmatprep.subr.bf16.mxu0 0
    %1218 = vmatpush1.bf16.msra.mxu0 0
    %1219 = vmatprep.subr.bf16.mxu0 0
    %1220 = vmatpush1.bf16.msra.mxu0 0
    %1221 = vmatprep.subr.bf16.mxu0 0
    %1222 = vmatpush1.bf16.msra.mxu0 0
    %1223 = vmatprep.mubr.bf16.mxu0 0
    %1224 = vmatmul.mubr.bf16.gmra.mrb[0].mxu0 %v1122
    %v1225 = vpop.f32.mrb[0].mxu0
    %v1226 = vadd.f32 %v1142, %v1225
    %v1227 = vpop.f32.mrb[0].mxu0
    %v1228 = vpop.f32.mrb[0].mxu0
    %v1229 = vadd.f32 %v1142, %v1228
    %v1230 = vpop.f32.mrb[0].mxu0
    %1231 = vdwg.mxu0
    %v1232 = vadd.f32 %v999, %v1226
    %v1233 = vadd.f32 %v1000, %v1229
    %1234 = vst.msk [vmem:[#allocation8] sm:$0xff] %vm73, %v1232
    %1235 = vst.msk [vmem:[#allocation8 + $0x8] sm:$0xff] %vm73, %v1233
    // Predicated region
    $region42: #{tpu_custom_call.1} parent=1 // pred_check
      _
    $region43: #{tpu_custom_call.1} parent=1 // pred_check_branch
      %1237 = sbr.rel (0) target = $region45
    $region44: #{tpu_custom_call.1} parent=1 // pred_region
      %s1239 = ssub.s32 256, 256
      %1240 = vsyncadd [#allocation4], %s1239
      %s1241 = sshll.u32 [#allocation8], 4
      %s1242 = int_to_ptr.vmem [resolvable:$true] %s1241
      %1247 = dma.vmem_to_hbm [thread:$0]  %s1242, 256, %s7, [#allocation4], 128, 128, 8
    $region45: #{tpu_custom_call.1} parent=1 // pred_fallthru
      _
    // Predicated region
    $region46: #{tpu_custom_call.1} parent=1 // pred_check
      _
    $region47: #{tpu_custom_call.1} parent=1 // pred_check_branch
      %1249 = sbr.rel (0) target = $region49
    $region48: #{tpu_custom_call.1} parent=1 // pred_region
      %1250 = dma.done [#allocation4], 256
    $region49: #{tpu_custom_call.1} parent=1 // pred_fallthru
      _
    %1251 = vsyncpa [#allocation3], 1
    %1252 = vsyncpa [#allocation6], 1
    %1253 = vsyncpa [#allocation4], 1

</llo_original>
